<compile_context>
chip_gen: v6e
topology: v6e:2x2x1
jax: 0.10.0
libtpu: 0.0.40
codegen_flags: <defaults>
</compile_context>

<pallas_src>
import functools

import numpy as np
import jax
import jax.numpy as jnp
from jax.experimental import pallas as pl
from jax.experimental.pallas import tpu as pltpu


# ----------------------------------------------------------------------------
# Fused Pallas kernel: entire VisualCritic forward (15 MXU matmuls, all f32)
# ----------------------------------------------------------------------------
def _visual_critic_kernel(p_ref, w1_ref, b1_ref, w2_ref, b2_ref,
                          l1w_ref, l1b_ref, l2w_ref, l2b_ref,
                          hw1_ref, hb1_ref, hw2_ref, hb2_ref,
                          how_ref, hob_ref, o_ref, *, nsp):
    f32 = jnp.float32
    bpad = p_ref.shape[0] // nsp          # padded batch rows per conv2 output position
    oc2 = w2_ref.shape[1]                 # conv2 output channels

    # ---- conv1 + ReLU, emitted directly as the conv2 im2col patch matrix ----
    #   rows  = (p2, b)  : conv2 output position x padded batch
    #   lanes = (k2, c1) : conv2 kernel offset   x conv1 output channel
    # w1_ref is block-diagonal over k2, so this single matmul evaluates conv1 at every
    # (position, offset) pair conv2 needs.  ReLU commutes with the replication.
    h1 = jnp.dot(p_ref[...], w1_ref[...], preferred_element_type=f32) + b1_ref[...]
    h1 = jnp.maximum(h1, 0.0)                                   # (nsp*bpad, 9*OC1)

    # ---- conv2 + ReLU: one im2col matmul ----
    h2 = jnp.dot(h1, w2_ref[...], preferred_element_type=f32) + b2_ref[...]
    h2 = jnp.maximum(h2, 0.0)                                   # (nsp*bpad, OC2)

    # ---- NCHW flatten + enc_l1 + ReLU ----
    # Contraction over the 144 = OC2*nsp features done as nsp accumulating matmuls over
    # static, sublane-aligned row slices (flatten permutation folded into l1w offline).
    z = None
    for p2 in range(nsp):
        rows = h2[p2 * bpad:(p2 + 1) * bpad, :]                 # (bpad, OC2) static slice
        w_p2 = l1w_ref[p2 * oc2:(p2 + 1) * oc2, :]              # (OC2, enc_hidden)
        t = jnp.dot(rows, w_p2, preferred_element_type=f32)
        z = t if z is None else z + t
    z = jnp.maximum(z + l1b_ref[...], 0.0)                      # (bpad, enc_hidden)

    # ---- enc_l2 (encoder output, no activation) ----
    feat = jnp.dot(z, l2w_ref[...], preferred_element_type=f32) + l2b_ref[...]

    # ---- StateCritic head MLP ----
    h = jnp.maximum(jnp.dot(feat, hw1_ref[...], preferred_element_type=f32) + hb1_ref[...], 0.0)
    h = jnp.maximum(jnp.dot(h, hw2_ref[...], preferred_element_type=f32) + hb2_ref[...], 0.0)
    # value head against a 128-lane-padded weight -> full-tile unmasked store
    v = jnp.dot(h, how_ref[...], preferred_element_type=f32) + hob_ref[...]
    o_ref[...] = v.astype(o_ref.dtype)                          # (bpad, 128); col 0 = value


# ----------------------------------------------------------------------------
# Parameter init (same reconstructed structure as before)
# ----------------------------------------------------------------------------
def init_params(key, in_c=4, hw=16, enc_output_dim=32, hidden_dim=32):
    ks = jax.random.split(key, 16)
    s = 0.05

    def W(k, shape):
        return (s * jax.random.normal(k, shape)).astype(jnp.float32)

    c1_oc, c2_oc, khw, stride = 8, 16, 3, 2
    oh1 = (hw - khw) // stride + 1
    oh2 = (oh1 - khw) // stride + 1
    flat_dim = c2_oc * oh2 * oh2
    enc_hidden = 64

    return {
        # encoder convs (PyTorch OIHW weights)
        "conv1_w": W(ks[0], (c1_oc, in_c, khw, khw)),
        "conv1_b": W(ks[1], (c1_oc,)),
        "conv2_w": W(ks[2], (c2_oc, c1_oc, khw, khw)),
        "conv2_b": W(ks[3], (c2_oc,)),
        # encoder linear layers (num_encoder_linear_layers = 2)
        "enc_l1_w": W(ks[4], (flat_dim, enc_hidden)),
        "enc_l1_b": W(ks[5], (enc_hidden,)),
        "enc_l2_w": W(ks[6], (enc_hidden, enc_output_dim)),
        "enc_l2_b": W(ks[7], (enc_output_dim,)),
        # StateCritic head: UniformLinearNetwork (num_layers-1 = 2 layers) + Linear(hidden, 1)
        "head_l1_w": W(ks[8], (enc_output_dim, hidden_dim)),
        "head_l1_b": W(ks[9], (hidden_dim,)),
        "head_l2_w": W(ks[10], (hidden_dim, hidden_dim)),
        "head_l2_b": W(ks[11], (hidden_dim,)),
        "head_out_w": W(ks[12], (hidden_dim, 1)),
        "head_out_b": W(ks[13], (1,)),
    }


# ----------------------------------------------------------------------------
# One-time (offline) weight re-layouts — all batch-independent, all f32
# ----------------------------------------------------------------------------
def prepare_kernel_constants(params, in_c, hw, k=3, stride=2):
    f32 = np.float32
    conv1_w = np.asarray(params["conv1_w"], f32)          # (OC1, C, k, k)
    conv2_w = np.asarray(params["conv2_w"], f32)          # (OC2, OC1, k, k)
    OC1, OC2 = conv1_w.shape[0], conv2_w.shape[0]
    nk = k * k
    oh1 = (hw - k) // stride + 1
    oh2 = (oh1 - k) // stride + 1
    nsp = oh2 * oh2
    q1 = in_c * nk                                         # conv1 patch length (36)

    # conv1 im2col weight, replicated block-diagonally over the nk conv2 offsets
    w1cat = conv1_w.reshape(OC1, q1).T                     # (q1, OC1), feature = c*9+i*3+j
    w1blk = np.zeros((nk * q1, nk * OC1), f32)
    for k2 in range(nk):
        w1blk[k2 * q1:(k2 + 1) * q1, k2 * OC1:(k2 + 1) * OC1] = w1cat
    b1w = np.tile(np.asarray(params["conv1_b"], f32), nk)  # (nk*OC1,)

    # conv2 im2col weight: rows ordered (k2, c1)
    w2cat = conv2_w.transpose(2, 3, 1, 0).reshape(nk * OC1, OC2)

    # enc_l1 weight permuted to (p2, c2)-block order (folds the PyTorch NCHW flatten,
    # feature = c2*nsp + p2, offline)
    l1w = np.asarray(params["enc_l1_w"], f32)              # (OC2*nsp, enc_hidden)
    enc_hidden = l1w.shape[1]
    l1w_perm = (l1w.reshape(OC2, nsp, enc_hidden)
                   .transpose(1, 0, 2)
                   .reshape(nsp * OC2, enc_hidden))

    # lane-pad the value head to 128 output columns (padded cols stay exactly 0)
    hd = np.asarray(params["head_out_w"], f32).shape[0]
    how = np.zeros((hd, 128), f32)
    how[:, :1] = np.asarray(params["head_out_w"], f32)
    hob = np.zeros((1, 128), f32)
    hob[0, 0] = float(np.asarray(params["head_out_b"], f32)[0])

    def row(x):
        return jnp.asarray(np.asarray(x, f32).reshape(1, -1))

    def mat(x):
        return jnp.asarray(np.asarray(x, f32))

    return dict(
        w1blk=mat(w1blk), b1=row(b1w),
        w2cat=mat(w2cat), b2=row(params["conv2_b"]),
        l1w=mat(l1w_perm), l1b=row(params["enc_l1_b"]),
        l2w=mat(params["enc_l2_w"]), l2b=row(params["enc_l2_b"]),
        hw1=mat(params["head_l1_w"]), hb1=row(params["head_l1_b"]),
        hw2=mat(params["head_l2_w"]), hb2=row(params["head_l2_b"]),
        how=mat(how), hob=mat(hob),
    )


# ----------------------------------------------------------------------------
# Static (trace-time) patch index table: for each conv2 output position p2, the nine
# conv1 patches (one per conv2 kernel offset k2) it consumes, as flat NHWC offsets.
# ----------------------------------------------------------------------------
def _patch_index(H, W, C, k=3, stride=2):
    oh1 = (H - k) // stride + 1
    oh2 = (oh1 - k) // stride + 1
    nsp = oh2 * oh2
    nk = k * k
    q1 = C * nk
    idx = np.zeros((nsp, nk * q1), dtype=np.int32)
    for r2 in range(oh2):
        for s2 in range(oh2):
            p2 = r2 * oh2 + s2
            for i2 in range(k):
                for j2 in range(k):
                    k2 = i2 * k + j2
                    r1 = stride * r2 + i2
                    s1 = stride * s2 + j2
                    for c in range(C):
                        for i1 in range(k):
                            for j1 in range(k):
                                h = stride * r1 + i1
                                w = stride * s1 + j1
                                idx[p2, k2 * q1 + c * nk + i1 * k + j1] = (h * W + w) * C + c
    return idx, oh2


# ----------------------------------------------------------------------------
# Forward: one static gather/pad in XLA on the tiny input + one fused pallas_call
# ----------------------------------------------------------------------------
@jax.jit
def visual_critic_forward(x_nchw, prep):
    B, C, H, W = x_nchw.shape
    k, stride = 3, 2
    idx, oh2 = _patch_index(H, W, C, k, stride)            # trace-time numpy constants
    nsp = oh2 * oh2
    npatch = idx.shape[1]

    # wrapper-side layout only: NHWC flatten + static im2col gather on the ~4 KB input,
    # rows ordered (p2, batch), batch rows zero-padded to a multiple of 8.
    x_flat = jnp.transpose(x_nchw, (0, 2, 3, 1)).reshape(B, H * W * C)
    patches = x_flat[:, idx.reshape(-1)].reshape(B, nsp, npatch)
    bpad = max(8, -(-B // 8) * 8)
    p2d = jnp.transpose(patches, (1, 0, 2))                 # (nsp, B, npatch)
    p2d = jnp.pad(p2d, ((0, 0), (0, bpad - B), (0, 0)))
    p2d = p2d.reshape(nsp * bpad, npatch).astype(jnp.float32)

    args = (p2d, prep["w1blk"], prep["b1"], prep["w2cat"], prep["b2"],
            prep["l1w"], prep["l1b"], prep["l2w"], prep["l2b"],
            prep["hw1"], prep["hb1"], prep["hw2"], prep["hb2"],
            prep["how"], prep["hob"])

    # Single un-pipelined invocation: no grid -> whole arrays live in VMEM once,
    # no double-buffering of the (small) constants.
    out = pl.pallas_call(
        functools.partial(_visual_critic_kernel, nsp=nsp),
        out_shape=jax.ShapeDtypeStruct((bpad, 128), jnp.float32),
    )(*args)
    return out[:B, :1]                                      # (B, 1)


# ----------------------------------------------------------------------------
# Pure-JAX f32 reference (same reconstructed architecture) for a sanity check
# ----------------------------------------------------------------------------
def reference_forward(x, params):
    def conv(h, w, b, stride):
        y = jax.lax.conv_general_dilated(
            h, w, window_strides=(stride, stride), padding="VALID",
            dimension_numbers=("NCHW", "OIHW", "NCHW"))
        return jax.nn.relu(y + b.reshape(1, -1, 1, 1))

    B = x.shape[0]
    h = conv(x, params["conv1_w"], params["conv1_b"], 2)
    h = conv(h, params["conv2_w"], params["conv2_b"], 2)
    h = h.reshape(B, -1)
    h = jax.nn.relu(h @ params["enc_l1_w"] + params["enc_l1_b"])
    feat = h @ params["enc_l2_w"] + params["enc_l2_b"]
    h = jax.nn.relu(feat @ params["head_l1_w"] + params["head_l1_b"])
    h = jax.nn.relu(h @ params["head_l2_w"] + params["head_l2_b"])
    return h @ params["head_out_w"] + params["head_out_b"]


if __name__ == "__main__":
    B, C, H, W = 2, 4, 16, 16
    x = jax.random.normal(jax.random.PRNGKey(0), (B, C, H, W), dtype=jnp.float32)
    params = init_params(jax.random.PRNGKey(1), in_c=C, hw=H,
                         enc_output_dim=32, hidden_dim=32)
    prep = prepare_kernel_constants(params, in_c=C, hw=H)

    out = jax.block_until_ready(visual_critic_forward(x, prep))
    assert out.shape == (B, 1) and out.dtype == jnp.float32

    ref = reference_forward(x, params)
    assert bool(jnp.all(jnp.isfinite(out)))
    assert bool(jnp.allclose(out, ref, atol=1e-4, rtol=1e-3)), (out, ref)
    print("KERNEL_OK")
</pallas_src>

<mosaic_0001>
module attributes {stable_mosaic.version = 11 : i64} {
  func.func @_visual_critic_kernel(%arg0: memref<72x324xf32, #tpu.memory_space<vmem>>, %arg1: memref<324x72xf32, #tpu.memory_space<vmem>>, %arg2: memref<1x72xf32, #tpu.memory_space<vmem>>, %arg3: memref<72x16xf32, #tpu.memory_space<vmem>>, %arg4: memref<1x16xf32, #tpu.memory_space<vmem>>, %arg5: memref<144x64xf32, #tpu.memory_space<vmem>>, %arg6: memref<1x64xf32, #tpu.memory_space<vmem>>, %arg7: memref<64x32xf32, #tpu.memory_space<vmem>>, %arg8: memref<1x32xf32, #tpu.memory_space<vmem>>, %arg9: memref<32x32xf32, #tpu.memory_space<vmem>>, %arg10: memref<1x32xf32, #tpu.memory_space<vmem>>, %arg11: memref<32x32xf32, #tpu.memory_space<vmem>>, %arg12: memref<1x32xf32, #tpu.memory_space<vmem>>, %arg13: memref<32x128xf32, #tpu.memory_space<vmem>>, %arg14: memref<1x128xf32, #tpu.memory_space<vmem>>, %arg15: memref<8x128xf32, #tpu.memory_space<vmem>>) attributes {dimension_semantics = [], scalar_prefetch = 0 : i64, scratch_operands = 0 : i64, tpu.core_type = #tpu.core_type<tc>} {
    %c0 = arith.constant 0 : index
    %c0_0 = arith.constant 0 : index
    %0 = vector.load %arg0[%c0, %c0_0] : memref<72x324xf32, #tpu.memory_space<vmem>>, vector<72x324xf32>
    %c0_1 = arith.constant 0 : index
    %c0_2 = arith.constant 0 : index
    %1 = vector.load %arg1[%c0_1, %c0_2] : memref<324x72xf32, #tpu.memory_space<vmem>>, vector<324x72xf32>
    %cst = arith.constant dense<0.000000e+00> : vector<72x72xf32>
    %2 = tpu.matmul %0, %1, %cst {dimension_numbers = #tpu.dot_dimension_numbers<[1], [0], [0], [1], [0, 0, 1, 1], [], []>} : vector<72x324xf32>, vector<324x72xf32>, vector<72x72xf32> -> vector<72x72xf32>
    %c0_3 = arith.constant 0 : index
    %c0_4 = arith.constant 0 : index
    %3 = vector.load %arg2[%c0_3, %c0_4] : memref<1x72xf32, #tpu.memory_space<vmem>>, vector<1x72xf32>
    %4 = vector.broadcast %3 : vector<1x72xf32> to vector<72x72xf32>
    %5 = arith.addf %2, %4 : vector<72x72xf32>
    %cst_5 = arith.constant 0.000000e+00 : f32
    %6 = vector.broadcast %cst_5 : f32 to vector<72x72xf32>
    %7 = arith.maximumf %5, %6 : vector<72x72xf32>
    %c0_6 = arith.constant 0 : index
    %c0_7 = arith.constant 0 : index
    %8 = vector.load %arg3[%c0_6, %c0_7] : memref<72x16xf32, #tpu.memory_space<vmem>>, vector<72x16xf32>
    %cst_8 = arith.constant dense<0.000000e+00> : vector<72x16xf32>
    %9 = tpu.matmul %7, %8, %cst_8 {dimension_numbers = #tpu.dot_dimension_numbers<[1], [0], [0], [1], [0, 0, 1, 1], [], []>} : vector<72x72xf32>, vector<72x16xf32>, vector<72x16xf32> -> vector<72x16xf32>
    %c0_9 = arith.constant 0 : index
    %c0_10 = arith.constant 0 : index
    %10 = vector.load %arg4[%c0_9, %c0_10] : memref<1x16xf32, #tpu.memory_space<vmem>>, vector<1x16xf32>
    %11 = vector.broadcast %10 : vector<1x16xf32> to vector<72x16xf32>
    %12 = arith.addf %9, %11 : vector<72x16xf32>
    %cst_11 = arith.constant 0.000000e+00 : f32
    %13 = vector.broadcast %cst_11 : f32 to vector<72x16xf32>
    %14 = arith.maximumf %12, %13 : vector<72x16xf32>
    %15 = vector.extract_strided_slice %14 {offsets = [0, 0], sizes = [8, 16], strides = [1, 1]} : vector<72x16xf32> to vector<8x16xf32>
    %c0_12 = arith.constant 0 : index
    %c0_13 = arith.constant 0 : index
    %16 = vector.load %arg5[%c0_12, %c0_13] : memref<144x64xf32, #tpu.memory_space<vmem>>, vector<16x64xf32>
    %cst_14 = arith.constant dense<0.000000e+00> : vector<8x64xf32>
    %17 = tpu.matmul %15, %16, %cst_14 {dimension_numbers = #tpu.dot_dimension_numbers<[1], [0], [0], [1], [0, 0, 1, 1], [], []>} : vector<8x16xf32>, vector<16x64xf32>, vector<8x64xf32> -> vector<8x64xf32>
    %18 = vector.extract_strided_slice %14 {offsets = [8, 0], sizes = [8, 16], strides = [1, 1]} : vector<72x16xf32> to vector<8x16xf32>
    %c16 = arith.constant 16 : index
    %c0_15 = arith.constant 0 : index
    %19 = vector.load %arg5[%c16, %c0_15] : memref<144x64xf32, #tpu.memory_space<vmem>>, vector<16x64xf32>
    %cst_16 = arith.constant dense<0.000000e+00> : vector<8x64xf32>
    %20 = tpu.matmul %18, %19, %cst_16 {dimension_numbers = #tpu.dot_dimension_numbers<[1], [0], [0], [1], [0, 0, 1, 1], [], []>} : vector<8x16xf32>, vector<16x64xf32>, vector<8x64xf32> -> vector<8x64xf32>
    %21 = arith.addf %17, %20 : vector<8x64xf32>
    %22 = vector.extract_strided_slice %14 {offsets = [16, 0], sizes = [8, 16], strides = [1, 1]} : vector<72x16xf32> to vector<8x16xf32>
    %c32 = arith.constant 32 : index
    %c0_17 = arith.constant 0 : index
    %23 = vector.load %arg5[%c32, %c0_17] : memref<144x64xf32, #tpu.memory_space<vmem>>, vector<16x64xf32>
    %cst_18 = arith.constant dense<0.000000e+00> : vector<8x64xf32>
    %24 = tpu.matmul %22, %23, %cst_18 {dimension_numbers = #tpu.dot_dimension_numbers<[1], [0], [0], [1], [0, 0, 1, 1], [], []>} : vector<8x16xf32>, vector<16x64xf32>, vector<8x64xf32> -> vector<8x64xf32>
    %25 = arith.addf %21, %24 : vector<8x64xf32>
    %26 = vector.extract_strided_slice %14 {offsets = [24, 0], sizes = [8, 16], strides = [1, 1]} : vector<72x16xf32> to vector<8x16xf32>
    %c48 = arith.constant 48 : index
    %c0_19 = arith.constant 0 : index
    %27 = vector.load %arg5[%c48, %c0_19] : memref<144x64xf32, #tpu.memory_space<vmem>>, vector<16x64xf32>
    %cst_20 = arith.constant dense<0.000000e+00> : vector<8x64xf32>
    %28 = tpu.matmul %26, %27, %cst_20 {dimension_numbers = #tpu.dot_dimension_numbers<[1], [0], [0], [1], [0, 0, 1, 1], [], []>} : vector<8x16xf32>, vector<16x64xf32>, vector<8x64xf32> -> vector<8x64xf32>
    %29 = arith.addf %25, %28 : vector<8x64xf32>
    %30 = vector.extract_strided_slice %14 {offsets = [32, 0], sizes = [8, 16], strides = [1, 1]} : vector<72x16xf32> to vector<8x16xf32>
    %c64 = arith.constant 64 : index
    %c0_21 = arith.constant 0 : index
    %31 = vector.load %arg5[%c64, %c0_21] : memref<144x64xf32, #tpu.memory_space<vmem>>, vector<16x64xf32>
    %cst_22 = arith.constant dense<0.000000e+00> : vector<8x64xf32>
    %32 = tpu.matmul %30, %31, %cst_22 {dimension_numbers = #tpu.dot_dimension_numbers<[1], [0], [0], [1], [0, 0, 1, 1], [], []>} : vector<8x16xf32>, vector<16x64xf32>, vector<8x64xf32> -> vector<8x64xf32>
    %33 = arith.addf %29, %32 : vector<8x64xf32>
    %34 = vector.extract_strided_slice %14 {offsets = [40, 0], sizes = [8, 16], strides = [1, 1]} : vector<72x16xf32> to vector<8x16xf32>
    %c80 = arith.constant 80 : index
    %c0_23 = arith.constant 0 : index
    %35 = vector.load %arg5[%c80, %c0_23] : memref<144x64xf32, #tpu.memory_space<vmem>>, vector<16x64xf32>
    %cst_24 = arith.constant dense<0.000000e+00> : vector<8x64xf32>
    %36 = tpu.matmul %34, %35, %cst_24 {dimension_numbers = #tpu.dot_dimension_numbers<[1], [0], [0], [1], [0, 0, 1, 1], [], []>} : vector<8x16xf32>, vector<16x64xf32>, vector<8x64xf32> -> vector<8x64xf32>
    %37 = arith.addf %33, %36 : vector<8x64xf32>
    %38 = vector.extract_strided_slice %14 {offsets = [48, 0], sizes = [8, 16], strides = [1, 1]} : vector<72x16xf32> to vector<8x16xf32>
    %c96 = arith.constant 96 : index
    %c0_25 = arith.constant 0 : index
    %39 = vector.load %arg5[%c96, %c0_25] : memref<144x64xf32, #tpu.memory_space<vmem>>, vector<16x64xf32>
    %cst_26 = arith.constant dense<0.000000e+00> : vector<8x64xf32>
    %40 = tpu.matmul %38, %39, %cst_26 {dimension_numbers = #tpu.dot_dimension_numbers<[1], [0], [0], [1], [0, 0, 1, 1], [], []>} : vector<8x16xf32>, vector<16x64xf32>, vector<8x64xf32> -> vector<8x64xf32>
    %41 = arith.addf %37, %40 : vector<8x64xf32>
    %42 = vector.extract_strided_slice %14 {offsets = [56, 0], sizes = [8, 16], strides = [1, 1]} : vector<72x16xf32> to vector<8x16xf32>
    %c112 = arith.constant 112 : index
    %c0_27 = arith.constant 0 : index
    %43 = vector.load %arg5[%c112, %c0_27] : memref<144x64xf32, #tpu.memory_space<vmem>>, vector<16x64xf32>
    %cst_28 = arith.constant dense<0.000000e+00> : vector<8x64xf32>
    %44 = tpu.matmul %42, %43, %cst_28 {dimension_numbers = #tpu.dot_dimension_numbers<[1], [0], [0], [1], [0, 0, 1, 1], [], []>} : vector<8x16xf32>, vector<16x64xf32>, vector<8x64xf32> -> vector<8x64xf32>
    %45 = arith.addf %41, %44 : vector<8x64xf32>
    %46 = vector.extract_strided_slice %14 {offsets = [64, 0], sizes = [8, 16], strides = [1, 1]} : vector<72x16xf32> to vector<8x16xf32>
    %c128 = arith.constant 128 : index
    %c0_29 = arith.constant 0 : index
    %47 = vector.load %arg5[%c128, %c0_29] : memref<144x64xf32, #tpu.memory_space<vmem>>, vector<16x64xf32>
    %cst_30 = arith.constant dense<0.000000e+00> : vector<8x64xf32>
    %48 = tpu.matmul %46, %47, %cst_30 {dimension_numbers = #tpu.dot_dimension_numbers<[1], [0], [0], [1], [0, 0, 1, 1], [], []>} : vector<8x16xf32>, vector<16x64xf32>, vector<8x64xf32> -> vector<8x64xf32>
    %49 = arith.addf %45, %48 : vector<8x64xf32>
    %c0_31 = arith.constant 0 : index
    %c0_32 = arith.constant 0 : index
    %50 = vector.load %arg6[%c0_31, %c0_32] : memref<1x64xf32, #tpu.memory_space<vmem>>, vector<1x64xf32>
    %51 = vector.broadcast %50 : vector<1x64xf32> to vector<8x64xf32>
    %52 = arith.addf %49, %51 : vector<8x64xf32>
    %cst_33 = arith.constant 0.000000e+00 : f32
    %53 = vector.broadcast %cst_33 : f32 to vector<8x64xf32>
    %54 = arith.maximumf %52, %53 : vector<8x64xf32>
    %c0_34 = arith.constant 0 : index
    %c0_35 = arith.constant 0 : index
    %55 = vector.load %arg7[%c0_34, %c0_35] : memref<64x32xf32, #tpu.memory_space<vmem>>, vector<64x32xf32>
    %cst_36 = arith.constant dense<0.000000e+00> : vector<8x32xf32>
    %56 = tpu.matmul %54, %55, %cst_36 {dimension_numbers = #tpu.dot_dimension_numbers<[1], [0], [0], [1], [0, 0, 1, 1], [], []>} : vector<8x64xf32>, vector<64x32xf32>, vector<8x32xf32> -> vector<8x32xf32>
    %c0_37 = arith.constant 0 : index
    %c0_38 = arith.constant 0 : index
    %57 = vector.load %arg8[%c0_37, %c0_38] : memref<1x32xf32, #tpu.memory_space<vmem>>, vector<1x32xf32>
    %58 = vector.broadcast %57 : vector<1x32xf32> to vector<8x32xf32>
    %59 = arith.addf %56, %58 : vector<8x32xf32>
    %c0_39 = arith.constant 0 : index
    %c0_40 = arith.constant 0 : index
    %60 = vector.load %arg9[%c0_39, %c0_40] : memref<32x32xf32, #tpu.memory_space<vmem>>, vector<32x32xf32>
    %cst_41 = arith.constant dense<0.000000e+00> : vector<8x32xf32>
    %61 = tpu.matmul %59, %60, %cst_41 {dimension_numbers = #tpu.dot_dimension_numbers<[1], [0], [0], [1], [0, 0, 1, 1], [], []>} : vector<8x32xf32>, vector<32x32xf32>, vector<8x32xf32> -> vector<8x32xf32>
    %c0_42 = arith.constant 0 : index
    %c0_43 = arith.constant 0 : index
    %62 = vector.load %arg10[%c0_42, %c0_43] : memref<1x32xf32, #tpu.memory_space<vmem>>, vector<1x32xf32>
    %63 = vector.broadcast %62 : vector<1x32xf32> to vector<8x32xf32>
    %64 = arith.addf %61, %63 : vector<8x32xf32>
    %cst_44 = arith.constant 0.000000e+00 : f32
    %65 = vector.broadcast %cst_44 : f32 to vector<8x32xf32>
    %66 = arith.maximumf %64, %65 : vector<8x32xf32>
    %c0_45 = arith.constant 0 : index
    %c0_46 = arith.constant 0 : index
    %67 = vector.load %arg11[%c0_45, %c0_46] : memref<32x32xf32, #tpu.memory_space<vmem>>, vector<32x32xf32>
    %cst_47 = arith.constant dense<0.000000e+00> : vector<8x32xf32>
    %68 = tpu.matmul %66, %67, %cst_47 {dimension_numbers = #tpu.dot_dimension_numbers<[1], [0], [0], [1], [0, 0, 1, 1], [], []>} : vector<8x32xf32>, vector<32x32xf32>, vector<8x32xf32> -> vector<8x32xf32>
    %c0_48 = arith.constant 0 : index
    %c0_49 = arith.constant 0 : index
    %69 = vector.load %arg12[%c0_48, %c0_49] : memref<1x32xf32, #tpu.memory_space<vmem>>, vector<1x32xf32>
    %70 = vector.broadcast %69 : vector<1x32xf32> to vector<8x32xf32>
    %71 = arith.addf %68, %70 : vector<8x32xf32>
    %cst_50 = arith.constant 0.000000e+00 : f32
    %72 = vector.broadcast %cst_50 : f32 to vector<8x32xf32>
    %73 = arith.maximumf %71, %72 : vector<8x32xf32>
    %c0_51 = arith.constant 0 : index
    %c0_52 = arith.constant 0 : index
    %74 = vector.load %arg13[%c0_51, %c0_52] : memref<32x128xf32, #tpu.memory_space<vmem>>, vector<32x128xf32>
    %cst_53 = arith.constant dense<0.000000e+00> : vector<8x128xf32>
    %75 = tpu.matmul %73, %74, %cst_53 {dimension_numbers = #tpu.dot_dimension_numbers<[1], [0], [0], [1], [0, 0, 1, 1], [], []>} : vector<8x32xf32>, vector<32x128xf32>, vector<8x128xf32> -> vector<8x128xf32>
    %c0_54 = arith.constant 0 : index
    %c0_55 = arith.constant 0 : index
    %76 = vector.load %arg14[%c0_54, %c0_55] : memref<1x128xf32, #tpu.memory_space<vmem>>, vector<1x128xf32>
    %77 = vector.broadcast %76 : vector<1x128xf32> to vector<8x128xf32>
    %78 = arith.addf %75, %77 : vector<8x128xf32>
    %c0_56 = arith.constant 0 : index
    %c0_57 = arith.constant 0 : index
    %79 = vector.load %arg15[%c0_56, %c0_57] : memref<8x128xf32, #tpu.memory_space<vmem>>, vector<8x128xf32>
    tpu.vector_store %arg15[%c0_56, %c0_57], %78 {strides = array<i32>} : memref<8x128xf32, #tpu.memory_space<vmem>>, vector<8x128xf32>,
    return
  }
}

</mosaic_0001>

<llo_original>
// kernel: visual_critic_forward.1
$region0: #{visual_critic_forward.1}
  #allocation0 [shape = 'u32[]', space=smem, size = 0x4, offset = 0x4, fixed_abs, tag = 'smem constant byte address 0x4 - core index']
  #allocation1 [shape = 'u32[144,128]{1,0:T(1,128)}', space=vmem, size = 0x12000, scoped, tag = 'internal scratch']
  %s0 = inlined_call_operand.vmem [shape: f32[72,324], index: 0, kind: input, shape index: {}]
  %s1 = inlined_call_operand.vmem [shape: f32[324,72], index: 1, kind: input, shape index: {}]
  %s2 = inlined_call_operand.vmem [shape: f32[1,72], index: 2, kind: input, shape index: {}]
  %s3 = inlined_call_operand.vmem [shape: f32[72,16], index: 3, kind: input, shape index: {}]
  %s4 = inlined_call_operand.vmem [shape: f32[1,16], index: 4, kind: input, shape index: {}]
  %s5 = inlined_call_operand.vmem [shape: f32[144,64], index: 5, kind: input, shape index: {}]
  %s6 = inlined_call_operand.vmem [shape: f32[1,64], index: 6, kind: input, shape index: {}]
  %s7 = inlined_call_operand.vmem [shape: f32[64,32], index: 7, kind: input, shape index: {}]
  %s8 = inlined_call_operand.vmem [shape: f32[1,32], index: 8, kind: input, shape index: {}]
  %s9 = inlined_call_operand.vmem [shape: f32[32,32], index: 9, kind: input, shape index: {}]
  %s10 = inlined_call_operand.vmem [shape: f32[1,32], index: 10, kind: input, shape index: {}]
  %s11 = inlined_call_operand.vmem [shape: f32[32,32], index: 11, kind: input, shape index: {}]
  %s12 = inlined_call_operand.vmem [shape: f32[1,32], index: 12, kind: input, shape index: {}]
  %s13 = inlined_call_operand.vmem [shape: f32[32,128], index: 13, kind: input, shape index: {}]
  %s14 = inlined_call_operand.vmem [shape: f32[1,128], index: 14, kind: input, shape index: {}]
  %s15 = inlined_call_operand.vmem [shape: f32[8,128], index: 15, kind: output, shape index: {}]
  %s16 = sld [smem:[#allocation0]]
  $region70: #{visual_critic_forward.1} parent=0
    _
  %s18 = ssub.s32 1, %s16
  %s19 = scalar_select 0, %s18, %s16
  // Predicated region
  $region2: #{visual_critic_forward.1} parent=0 // pred_check
    _
  $region3: #{visual_critic_forward.1} parent=0 // pred_check_branch
    %21 = sbr.rel (0) target = $region5
  $region4: #{visual_critic_forward.1} parent=0 // pred_region
    _
  $region5: #{visual_critic_forward.1} parent=0 // pred_fallthru
    _
  // Predicated region
  $region6: #{visual_critic_forward.1} parent=0 // pred_check
    _
  $region7: #{visual_critic_forward.1} parent=0 // pred_check_branch
    %23 = sbr.rel (0) target = $region9
  $region8: #{visual_critic_forward.1} parent=0 // pred_region
    _
  $region9: #{visual_critic_forward.1} parent=0 // pred_fallthru
    _
  // Predicated region
  $region10: #{visual_critic_forward.1} parent=0 // pred_check
    _
  $region11: #{visual_critic_forward.1} parent=0 // pred_check_branch
    %25 = sbr.rel (0) target = $region13
  $region12: #{visual_critic_forward.1} parent=0 // pred_region
    _
  $region13: #{visual_critic_forward.1} parent=0 // pred_fallthru
    _
  // Predicated region
  $region14: #{visual_critic_forward.1} parent=0 // pred_check
    _
  $region15: #{visual_critic_forward.1} parent=0 // pred_check_branch
    %27 = sbr.rel (0) target = $region17
  $region16: #{visual_critic_forward.1} parent=0 // pred_region
    _
  $region17: #{visual_critic_forward.1} parent=0 // pred_fallthru
    _
  // Predicated region
  $region18: #{visual_critic_forward.1} parent=0 // pred_check
    _
  $region19: #{visual_critic_forward.1} parent=0 // pred_check_branch
    %29 = sbr.rel (0) target = $region21
  $region20: #{visual_critic_forward.1} parent=0 // pred_region
    _
  $region21: #{visual_critic_forward.1} parent=0 // pred_fallthru
    _
  // Predicated region
  $region22: #{visual_critic_forward.1} parent=0 // pred_check
    _
  $region23: #{visual_critic_forward.1} parent=0 // pred_check_branch
    %31 = sbr.rel (0) target = $region25
  $region24: #{visual_critic_forward.1} parent=0 // pred_region
    _
  $region25: #{visual_critic_forward.1} parent=0 // pred_fallthru
    _
  // Predicated region
  $region26: #{visual_critic_forward.1} parent=0 // pred_check
    _
  $region27: #{visual_critic_forward.1} parent=0 // pred_check_branch
    %33 = sbr.rel (0) target = $region29
  $region28: #{visual_critic_forward.1} parent=0 // pred_region
    _
  $region29: #{visual_critic_forward.1} parent=0 // pred_fallthru
    _
  // Predicated region
  $region30: #{visual_critic_forward.1} parent=0 // pred_check
    _
  $region31: #{visual_critic_forward.1} parent=0 // pred_check_branch
    %35 = sbr.rel (0) target = $region33
  $region32: #{visual_critic_forward.1} parent=0 // pred_region
    _
  $region33: #{visual_critic_forward.1} parent=0 // pred_fallthru
    _
  // Predicated region
  $region34: #{visual_critic_forward.1} parent=0 // pred_check
    _
  $region35: #{visual_critic_forward.1} parent=0 // pred_check_branch
    %37 = sbr.rel (0) target = $region37
  $region36: #{visual_critic_forward.1} parent=0 // pred_region
    _
  $region37: #{visual_critic_forward.1} parent=0 // pred_fallthru
    _
  // Predicated region
  $region38: #{visual_critic_forward.1} parent=0 // pred_check
    _
  $region39: #{visual_critic_forward.1} parent=0 // pred_check_branch
    %39 = sbr.rel (0) target = $region41
  $region40: #{visual_critic_forward.1} parent=0 // pred_region
    _
  $region41: #{visual_critic_forward.1} parent=0 // pred_fallthru
    _
  // Predicated region
  $region42: #{visual_critic_forward.1} parent=0 // pred_check
    _
  $region43: #{visual_critic_forward.1} parent=0 // pred_check_branch
    %41 = sbr.rel (0) target = $region45
  $region44: #{visual_critic_forward.1} parent=0 // pred_region
    _
  $region45: #{visual_critic_forward.1} parent=0 // pred_fallthru
    _
  // Predicated region
  $region46: #{visual_critic_forward.1} parent=0 // pred_check
    _
  $region47: #{visual_critic_forward.1} parent=0 // pred_check_branch
    %43 = sbr.rel (0) target = $region49
  $region48: #{visual_critic_forward.1} parent=0 // pred_region
    _
  $region49: #{visual_critic_forward.1} parent=0 // pred_fallthru
    _
  // Predicated region
  $region50: #{visual_critic_forward.1} parent=0 // pred_check
    _
  $region51: #{visual_critic_forward.1} parent=0 // pred_check_branch
    %45 = sbr.rel (0) target = $region53
  $region52: #{visual_critic_forward.1} parent=0 // pred_region
    _
  $region53: #{visual_critic_forward.1} parent=0 // pred_fallthru
    _
  // Predicated region
  $region54: #{visual_critic_forward.1} parent=0 // pred_check
    _
  $region55: #{visual_critic_forward.1} parent=0 // pred_check_branch
    %47 = sbr.rel (0) target = $region57
  $region56: #{visual_critic_forward.1} parent=0 // pred_region
    _
  $region57: #{visual_critic_forward.1} parent=0 // pred_fallthru
    _
  // Predicated region
  $region58: #{visual_critic_forward.1} parent=0 // pred_check
    _
  $region59: #{visual_critic_forward.1} parent=0 // pred_check_branch
    %49 = sbr.rel (0) target = $region61
  $region60: #{visual_critic_forward.1} parent=0 // pred_region
    _
  $region61: #{visual_critic_forward.1} parent=0 // pred_fallthru
    _
  %v50 = vld [vmem:[%s0] sm:$0xff]
  %v51 = vld [vmem:[%s0 + $0x8] sm:$0xff]
  %v52 = vld [vmem:[%s0 + $0x10] sm:$0xff]
  %v53 = vld [vmem:[%s0 + $0x18] sm:$0xff]
  %v54 = vld [vmem:[%s0 + $0x20] sm:$0xff]
  %v55 = vld [vmem:[%s0 + $0x28] sm:$0xff]
  %v56 = vld [vmem:[%s0 + $0x30] sm:$0xff]
  %v57 = vld [vmem:[%s0 + $0x38] sm:$0xff]
  %v58 = vld [vmem:[%s0 + $0x40] sm:$0xff]
  %v59 = vld [vmem:[%s0 + $0x48] sm:$0xff]
  %v60 = vld [vmem:[%s0 + $0x50] sm:$0xff]
  %v61 = vld [vmem:[%s0 + $0x58] sm:$0xff]
  %v62 = vld [vmem:[%s0 + $0x60] sm:$0xff]
  %v63 = vld [vmem:[%s0 + $0x68] sm:$0xff]
  %v64 = vld [vmem:[%s0 + $0x70] sm:$0xff]
  %v65 = vld [vmem:[%s0 + $0x78] sm:$0xff]
  %v66 = vld [vmem:[%s0 + $0x80] sm:$0xff]
  %v67 = vld [vmem:[%s0 + $0x88] sm:$0xff]
  %v68 = vld [vmem:[%s0 + $0x90] sm:$0xff]
  %v69 = vld [vmem:[%s0 + $0x98] sm:$0xff]
  %v70 = vld [vmem:[%s0 + $0xa0] sm:$0xff]
  %v71 = vld [vmem:[%s0 + $0xa8] sm:$0xff]
  %v72 = vld [vmem:[%s0 + $0xb0] sm:$0xff]
  %v73 = vld [vmem:[%s0 + $0xb8] sm:$0xff]
  %v74 = vld [vmem:[%s0 + $0xc0] sm:$0xff]
  %v75 = vld [vmem:[%s0 + $0xc8] sm:$0xff]
  %v76 = vld [vmem:[%s0 + $0xd0] sm:$0xff]
  %v77 = vld [vmem:[%s1] sm:$0xff]
  %v78 = vld [vmem:[%s1 + $0x8] sm:$0xff]
  %v79 = vld [vmem:[%s1 + $0x10] sm:$0xff]
  %v80 = vld [vmem:[%s1 + $0x18] sm:$0xff]
  %v81 = vld [vmem:[%s1 + $0x20] sm:$0xff]
  %v82 = vld [vmem:[%s1 + $0x28] sm:$0xff]
  %v83 = vld [vmem:[%s1 + $0x30] sm:$0xff]
  %v84 = vld [vmem:[%s1 + $0x38] sm:$0xff]
  %v85 = vld [vmem:[%s1 + $0x40] sm:$0xff]
  %v86 = vld [vmem:[%s1 + $0x48] sm:$0xff]
  %v87 = vld [vmem:[%s1 + $0x50] sm:$0xff]
  %v88 = vld [vmem:[%s1 + $0x58] sm:$0xff]
  %v89 = vld [vmem:[%s1 + $0x60] sm:$0xff]
  %v90 = vld [vmem:[%s1 + $0x68] sm:$0xff]
  %v91 = vld [vmem:[%s1 + $0x70] sm:$0xff]
  %v92 = vld [vmem:[%s1 + $0x78] sm:$0xff]
  %v93 = vld [vmem:[%s1 + $0x80] sm:$0xff]
  %v94 = vld [vmem:[%s1 + $0x88] sm:$0xff]
  %v95 = vld [vmem:[%s1 + $0x90] sm:$0xff]
  %v96 = vld [vmem:[%s1 + $0x98] sm:$0xff]
  %v97 = vld [vmem:[%s1 + $0xa0] sm:$0xff]
  %v98 = vld [vmem:[%s1 + $0xa8] sm:$0xff]
  %v99 = vld [vmem:[%s1 + $0xb0] sm:$0xff]
  %v100 = vld [vmem:[%s1 + $0xb8] sm:$0xff]
  %v101 = vld [vmem:[%s1 + $0xc0] sm:$0xff]
  %v102 = vld [vmem:[%s1 + $0xc8] sm:$0xff]
  %v103 = vld [vmem:[%s1 + $0xd0] sm:$0xff]
  %v104 = vld [vmem:[%s1 + $0xd8] sm:$0xff]
  %v105 = vld [vmem:[%s1 + $0xe0] sm:$0xff]
  %v106 = vld [vmem:[%s1 + $0xe8] sm:$0xff]
  %v107 = vld [vmem:[%s1 + $0xf0] sm:$0xff]
  %v108 = vld [vmem:[%s1 + $0xf8] sm:$0xff]
  %v109 = vld [vmem:[%s1 + $0x100] sm:$0xff]
  %v110 = vld [vmem:[%s1 + $0x108] sm:$0xff]
  %v111 = vld [vmem:[%s1 + $0x110] sm:$0xff]
  %v112 = vld [vmem:[%s1 + $0x118] sm:$0xff]
  %v113 = vld [vmem:[%s1 + $0x120] sm:$0xff]
  %v114 = vld [vmem:[%s1 + $0x128] sm:$0xff]
  %v115 = vld [vmem:[%s1 + $0x130] sm:$0xff]
  %v116 = vld [vmem:[%s1 + $0x138] sm:$0xff]
  %v117 = vld [vmem:[%s1 + $0x140] sm:$0xf]
  %v118 = vld [vmem:[%s2] sm:$0x1]
  %v120 = vlaneseq
  %v121 = vshrl.u32 %v120, 7
  %v122 = vsub.s32 0, %v121
  %v123 = vrot.slane %v118, %v122
  %vm125 = vcmask 556032
  %v127 = vsel %vm125, %v52, 0
  %v130 = vsel %vm125, %v55, 0
  %v133 = vsel %vm125, %v58, 0
  %v136 = vsel %vm125, %v61, 0
  %v139 = vsel %vm125, %v64, 0
  %v142 = vsel %vm125, %v67, 0
  %v145 = vsel %vm125, %v70, 0
  %v148 = vsel %vm125, %v73, 0
  %v151 = vsel %vm125, %v76, 0
  %vm153 = vcmask 1043456
  %v155 = vsel %vm153, %v117, 0
  %157 = vmatprep.subr.mxu0 0.0
  %158 = vmatpush1.msra.mxu0 %v92
  %159 = vmatprep.subr.mxu0 0.0
  %160 = vmatpush1.msra.mxu0 %v91
  %161 = vmatprep.subr.mxu0 0.0
  %162 = vmatpush1.msra.mxu0 %v90
  %163 = vmatprep.subr.mxu0 0.0
  %164 = vmatpush1.msra.mxu0 %v89
  %165 = vmatprep.subr.mxu0 0.0
  %166 = vmatpush1.msra.mxu0 %v88
  %167 = vmatprep.subr.mxu0 0.0
  %168 = vmatpush1.msra.mxu0 %v87
  %169 = vmatprep.subr.mxu0 0.0
  %170 = vmatpush1.msra.mxu0 %v86
  %171 = vmatprep.subr.mxu0 0.0
  %172 = vmatpush1.msra.mxu0 %v85
  %173 = vmatprep.subr.mxu0 0.0
  %174 = vmatpush1.msra.mxu0 %v84
  %175 = vmatprep.subr.mxu0 0.0
  %176 = vmatpush1.msra.mxu0 %v83
  %177 = vmatprep.subr.mxu0 0.0
  %178 = vmatpush1.msra.mxu0 %v82
  %179 = vmatprep.subr.mxu0 0.0
  %180 = vmatpush1.msra.mxu0 %v81
  %181 = vmatprep.subr.mxu0 0.0
  %182 = vmatpush1.msra.mxu0 %v80
  %183 = vmatprep.subr.mxu0 0.0
  %184 = vmatpush1.msra.mxu0 %v79
  %185 = vmatprep.subr.mxu0 0.0
  %186 = vmatpush1.msra.mxu0 %v78
  %187 = vmatprep.subr.mxu0 0.0
  %188 = vmatpush1.msra.mxu0 %v77
  %189 = vmatprep.subr.mxu0 0.0
  %190 = vmatpush2.msra.mxu0 %v108
  %191 = vmatprep.subr.mxu0 0.0
  %192 = vmatpush2.msra.mxu0 %v107
  %193 = vmatprep.subr.mxu0 0.0
  %194 = vmatpush2.msra.mxu0 %v106
  %195 = vmatprep.subr.mxu0 0.0
  %196 = vmatpush2.msra.mxu0 %v105
  %197 = vmatprep.subr.mxu0 0.0
  %198 = vmatpush2.msra.mxu0 %v104
  %199 = vmatprep.subr.mxu0 0.0
  %200 = vmatpush2.msra.mxu0 %v103
  %201 = vmatprep.subr.mxu0 0.0
  %202 = vmatpush2.msra.mxu0 %v102
  %203 = vmatprep.subr.mxu0 0.0
  %204 = vmatpush2.msra.mxu0 %v101
  %205 = vmatprep.subr.mxu0 0.0
  %206 = vmatpush2.msra.mxu0 %v100
  %207 = vmatprep.subr.mxu0 0.0
  %208 = vmatpush2.msra.mxu0 %v99
  %209 = vmatprep.subr.mxu0 0.0
  %210 = vmatpush2.msra.mxu0 %v98
  %211 = vmatprep.subr.mxu0 0.0
  %212 = vmatpush2.msra.mxu0 %v97
  %213 = vmatprep.subr.mxu0 0.0
  %214 = vmatpush2.msra.mxu0 %v96
  %215 = vmatprep.subr.mxu0 0.0
  %216 = vmatpush2.msra.mxu0 %v95
  %217 = vmatprep.subr.mxu0 0.0
  %218 = vmatpush2.msra.mxu0 %v94
  %219 = vmatprep.subr.mxu0 0.0
  %220 = vmatpush2.msra.mxu0 %v93
  %221 = vmatprep.mubr.f32.mxu0 %v51
  %222 = vmatmul.mubr.f32.gmra.mxu0 %v50
  %v223 = vpop.f32.mrf.mxu0
  %v224 = vadd.f32 %v123, %v223
  %v225 = vpop.f32.mrf.mxu0
  %226 = vmatprep.mubr.f32.mxu0 %v54
  %227 = vmatmul.mubr.f32.gmra.mxu0 %v53
  %v228 = vpop.f32.mrf.mxu0
  %v229 = vadd.f32 %v123, %v228
  %v230 = vpop.f32.mrf.mxu0
  %231 = vmatprep.mubr.f32.mxu0 %v57
  %232 = vmatmul.mubr.f32.gmra.mxu0 %v56
  %v233 = vpop.f32.mrf.mxu0
  %v234 = vadd.f32 %v123, %v233
  %v235 = vpop.f32.mrf.mxu0
  %236 = vmatprep.mubr.f32.mxu0 %v60
  %237 = vmatmul.mubr.f32.gmra.mxu0 %v59
  %v238 = vpop.f32.mrf.mxu0
  %v239 = vadd.f32 %v123, %v238
  %v240 = vpop.f32.mrf.mxu0
  %241 = vmatprep.mubr.f32.mxu0 %v63
  %242 = vmatmul.mubr.f32.gmra.mxu0 %v62
  %v243 = vpop.f32.mrf.mxu0
  %v244 = vadd.f32 %v123, %v243
  %v245 = vpop.f32.mrf.mxu0
  %246 = vmatprep.mubr.f32.mxu0 %v66
  %247 = vmatmul.mubr.f32.gmra.mxu0 %v65
  %v248 = vpop.f32.mrf.mxu0
  %v249 = vadd.f32 %v123, %v248
  %v250 = vpop.f32.mrf.mxu0
  %251 = vmatprep.mubr.f32.mxu0 %v69
  %252 = vmatmul.mubr.f32.gmra.mxu0 %v68
  %v253 = vpop.f32.mrf.mxu0
  %v254 = vadd.f32 %v123, %v253
  %v255 = vpop.f32.mrf.mxu0
  %256 = vmatprep.mubr.f32.mxu0 %v72
  %257 = vmatmul.mubr.f32.gmra.mxu0 %v71
  %v258 = vpop.f32.mrf.mxu0
  %v259 = vadd.f32 %v123, %v258
  %v260 = vpop.f32.mrf.mxu0
  %261 = vmatprep.mubr.f32.mxu0 %v75
  %262 = vmatmul.mubr.f32.gmra.mxu0 %v74
  %v263 = vpop.f32.mrf.mxu0
  %v264 = vadd.f32 %v123, %v263
  %v265 = vpop.f32.mrf.mxu0
  %266 = vdwg.mxu0
  %267 = vmatprep.subr.mxu0 0.0
  %268 = vmatpush1.msra.mxu0 0.0
  %269 = vmatprep.subr.mxu0 0.0
  %270 = vmatpush1.msra.mxu0 0.0
  %271 = vmatprep.subr.mxu0 0.0
  %272 = vmatpush1.msra.mxu0 0.0
  %273 = vmatprep.subr.mxu0 0.0
  %274 = vmatpush1.msra.mxu0 0.0
  %275 = vmatprep.subr.mxu0 0.0
  %276 = vmatpush1.msra.mxu0 0.0
  %277 = vmatprep.subr.mxu0 0.0
  %278 = vmatpush1.msra.mxu0 0.0
  %279 = vmatprep.subr.mxu0 0.0
  %280 = vmatpush1.msra.mxu0 0.0
  %281 = vmatprep.subr.mxu0 0.0
  %282 = vmatpush1.msra.mxu0 %v155
  %283 = vmatprep.subr.mxu0 0.0
  %284 = vmatpush1.msra.mxu0 %v116
  %285 = vmatprep.subr.mxu0 0.0
  %286 = vmatpush1.msra.mxu0 %v115
  %287 = vmatprep.subr.mxu0 0.0
  %288 = vmatpush1.msra.mxu0 %v114
  %289 = vmatprep.subr.mxu0 0.0
  %290 = vmatpush1.msra.mxu0 %v113
  %291 = vmatprep.subr.mxu0 0.0
  %292 = vmatpush1.msra.mxu0 %v112
  %293 = vmatprep.subr.mxu0 0.0
  %294 = vmatpush1.msra.mxu0 %v111
  %295 = vmatprep.subr.mxu0 0.0
  %296 = vmatpush1.msra.mxu0 %v110
  %297 = vmatprep.subr.mxu0 0.0
  %298 = vmatpush1.msra.mxu0 %v109
  %299 = vmatprep.subr.mxu0 0.0
  %300 = vmatpush2.msra.mxu0 0.0
  %301 = vmatprep.subr.mxu0 0.0
  %302 = vmatpush2.msra.mxu0 0.0
  %303 = vmatprep.subr.mxu0 0.0
  %304 = vmatpush2.msra.mxu0 0.0
  %305 = vmatprep.subr.mxu0 0.0
  %306 = vmatpush2.msra.mxu0 0.0
  %307 = vmatprep.subr.mxu0 0.0
  %308 = vmatpush2.msra.mxu0 0.0
  %309 = vmatprep.subr.mxu0 0.0
  %310 = vmatpush2.msra.mxu0 0.0
  %311 = vmatprep.subr.mxu0 0.0
  %312 = vmatpush2.msra.mxu0 0.0
  %313 = vmatprep.subr.mxu0 0.0
  %314 = vmatpush2.msra.mxu0 0.0
  %315 = vmatprep.subr.mxu0 0.0
  %316 = vmatpush2.msra.mxu0 0.0
  %317 = vmatprep.subr.mxu0 0.0
  %318 = vmatpush2.msra.mxu0 0.0
  %319 = vmatprep.subr.mxu0 0.0
  %320 = vmatpush2.msra.mxu0 0.0
  %321 = vmatprep.subr.mxu0 0.0
  %322 = vmatpush2.msra.mxu0 0.0
  %323 = vmatprep.subr.mxu0 0.0
  %324 = vmatpush2.msra.mxu0 0.0
  %325 = vmatprep.subr.mxu0 0.0
  %326 = vmatpush2.msra.mxu0 0.0
  %327 = vmatprep.subr.mxu0 0.0
  %328 = vmatpush2.msra.mxu0 0.0
  %329 = vmatprep.subr.mxu0 0.0
  %330 = vmatpush2.msra.mxu0 0.0
  %331 = vmatprep.mubr.f32.mxu0 0.0
  %332 = vmatmul.mubr.f32.gmra.mxu0 %v127
  %v333 = vpop.f32.mrf.mxu0
  %v334 = vadd.f32 %v224, %v333
  %v335 = vpop.f32.mrf.mxu0
  %336 = vmatprep.mubr.f32.mxu0 0.0
  %337 = vmatmul.mubr.f32.gmra.mxu0 %v130
  %v338 = vpop.f32.mrf.mxu0
  %v339 = vadd.f32 %v229, %v338
  %v340 = vpop.f32.mrf.mxu0
  %341 = vmatprep.mubr.f32.mxu0 0.0
  %342 = vmatmul.mubr.f32.gmra.mxu0 %v133
  %v343 = vpop.f32.mrf.mxu0
  %v344 = vadd.f32 %v234, %v343
  %v345 = vpop.f32.mrf.mxu0
  %346 = vmatprep.mubr.f32.mxu0 0.0
  %347 = vmatmul.mubr.f32.gmra.mxu0 %v136
  %v348 = vpop.f32.mrf.mxu0
  %v349 = vadd.f32 %v239, %v348
  %v350 = vpop.f32.mrf.mxu0
  %351 = vmatprep.mubr.f32.mxu0 0.0
  %352 = vmatmul.mubr.f32.gmra.mxu0 %v139
  %v353 = vpop.f32.mrf.mxu0
  %v354 = vadd.f32 %v244, %v353
  %v355 = vpop.f32.mrf.mxu0
  %356 = vmatprep.mubr.f32.mxu0 0.0
  %357 = vmatmul.mubr.f32.gmra.mxu0 %v142
  %v358 = vpop.f32.mrf.mxu0
  %v359 = vadd.f32 %v249, %v358
  %v360 = vpop.f32.mrf.mxu0
  %361 = vmatprep.mubr.f32.mxu0 0.0
  %362 = vmatmul.mubr.f32.gmra.mxu0 %v145
  %v363 = vpop.f32.mrf.mxu0
  %v364 = vadd.f32 %v254, %v363
  %v365 = vpop.f32.mrf.mxu0
  %366 = vmatprep.mubr.f32.mxu0 0.0
  %367 = vmatmul.mubr.f32.gmra.mxu0 %v148
  %v368 = vpop.f32.mrf.mxu0
  %v369 = vadd.f32 %v259, %v368
  %v370 = vpop.f32.mrf.mxu0
  %371 = vmatprep.mubr.f32.mxu0 0.0
  %372 = vmatmul.mubr.f32.gmra.mxu0 %v151
  %v373 = vpop.f32.mrf.mxu0
  %v374 = vadd.f32 %v264, %v373
  %v375 = vpop.f32.mrf.mxu0
  %376 = vdwg.mxu0
  %v377 = vmax.f32 %v334, 0.0
  %v378 = vmax.f32 %v339, 0.0
  %v379 = vmax.f32 %v344, 0.0
  %v380 = vmax.f32 %v349, 0.0
  %v381 = vmax.f32 %v354, 0.0
  %v382 = vmax.f32 %v359, 0.0
  %v383 = vmax.f32 %v364, 0.0
  %v384 = vmax.f32 %v369, 0.0
  %v385 = vmax.f32 %v374, 0.0
  %v386 = vld [vmem:[%s3] sm:$0xff]
  %v387 = vld [vmem:[%s3 + $0x8] sm:$0xff]
  %v388 = vld [vmem:[%s3 + $0x10] sm:$0xff]
  %v389 = vld [vmem:[%s3 + $0x18] sm:$0xff]
  %v390 = vld [vmem:[%s3 + $0x20] sm:$0xff]
  %v391 = vld [vmem:[%s3 + $0x28] sm:$0xff]
  %v392 = vld [vmem:[%s3 + $0x30] sm:$0xff]
  %v393 = vld [vmem:[%s3 + $0x38] sm:$0xff]
  %v394 = vld [vmem:[%s3 + $0x40] sm:$0xff]
  %v395 = vld [vmem:[%s4] sm:$0x1]
  %v397 = vlaneseq
  %v398 = vshrl.u32 %v397, 7
  %v399 = vsub.s32 0, %v398
  %v400 = vrot.slane %v395, %v399
  %vm402 = vcmask 588800
  %v404 = vsel %vm402, %v377, 0
  %v407 = vsel %vm402, %v378, 0
  %v410 = vsel %vm402, %v379, 0
  %v413 = vsel %vm402, %v380, 0
  %v416 = vsel %vm402, %v381, 0
  %v419 = vsel %vm402, %v382, 0
  %v422 = vsel %vm402, %v383, 0
  %v425 = vsel %vm402, %v384, 0
  %v428 = vsel %vm402, %v385, 0
  %430 = vmatprep.subr.mxu0 0.0
  %431 = vmatpush1.msra.mxu0 0.0
  %432 = vmatprep.subr.mxu0 0.0
  %433 = vmatpush1.msra.mxu0 0.0
  %434 = vmatprep.subr.mxu0 0.0
  %435 = vmatpush1.msra.mxu0 0.0
  %436 = vmatprep.subr.mxu0 0.0
  %437 = vmatpush1.msra.mxu0 0.0
  %438 = vmatprep.subr.mxu0 0.0
  %439 = vmatpush1.msra.mxu0 0.0
  %440 = vmatprep.subr.mxu0 0.0
  %441 = vmatpush1.msra.mxu0 0.0
  %442 = vmatprep.subr.mxu0 0.0
  %443 = vmatpush1.msra.mxu0 0.0
  %444 = vmatprep.subr.mxu0 0.0
  %445 = vmatpush1.msra.mxu0 %v394
  %446 = vmatprep.subr.mxu0 0.0
  %447 = vmatpush1.msra.mxu0 %v393
  %448 = vmatprep.subr.mxu0 0.0
  %449 = vmatpush1.msra.mxu0 %v392
  %450 = vmatprep.subr.mxu0 0.0
  %451 = vmatpush1.msra.mxu0 %v391
  %452 = vmatprep.subr.mxu0 0.0
  %453 = vmatpush1.msra.mxu0 %v390
  %454 = vmatprep.subr.mxu0 0.0
  %455 = vmatpush1.msra.mxu0 %v389
  %456 = vmatprep.subr.mxu0 0.0
  %457 = vmatpush1.msra.mxu0 %v388
  %458 = vmatprep.subr.mxu0 0.0
  %459 = vmatpush1.msra.mxu0 %v387
  %460 = vmatprep.subr.mxu0 0.0
  %461 = vmatpush1.msra.mxu0 %v386
  %462 = vmatprep.subr.mxu0 0.0
  %463 = vmatpush2.msra.mxu0 0.0
  %464 = vmatprep.subr.mxu0 0.0
  %465 = vmatpush2.msra.mxu0 0.0
  %466 = vmatprep.subr.mxu0 0.0
  %467 = vmatpush2.msra.mxu0 0.0
  %468 = vmatprep.subr.mxu0 0.0
  %469 = vmatpush2.msra.mxu0 0.0
  %470 = vmatprep.subr.mxu0 0.0
  %471 = vmatpush2.msra.mxu0 0.0
  %472 = vmatprep.subr.mxu0 0.0
  %473 = vmatpush2.msra.mxu0 0.0
  %474 = vmatprep.subr.mxu0 0.0
  %475 = vmatpush2.msra.mxu0 0.0
  %476 = vmatprep.subr.mxu0 0.0
  %477 = vmatpush2.msra.mxu0 0.0
  %478 = vmatprep.subr.mxu0 0.0
  %479 = vmatpush2.msra.mxu0 0.0
  %480 = vmatprep.subr.mxu0 0.0
  %481 = vmatpush2.msra.mxu0 0.0
  %482 = vmatprep.subr.mxu0 0.0
  %483 = vmatpush2.msra.mxu0 0.0
  %484 = vmatprep.subr.mxu0 0.0
  %485 = vmatpush2.msra.mxu0 0.0
  %486 = vmatprep.subr.mxu0 0.0
  %487 = vmatpush2.msra.mxu0 0.0
  %488 = vmatprep.subr.mxu0 0.0
  %489 = vmatpush2.msra.mxu0 0.0
  %490 = vmatprep.subr.mxu0 0.0
  %491 = vmatpush2.msra.mxu0 0.0
  %492 = vmatprep.subr.mxu0 0.0
  %493 = vmatpush2.msra.mxu0 0.0
  %494 = vmatprep.mubr.f32.mxu0 0.0
  %495 = vmatmul.mubr.f32.gmra.mxu0 %v404
  %v496 = vpop.f32.mrf.mxu0
  %v497 = vadd.f32 %v400, %v496
  %v498 = vpop.f32.mrf.mxu0
  %499 = vmatprep.mubr.f32.mxu0 0.0
  %500 = vmatmul.mubr.f32.gmra.mxu0 %v407
  %v501 = vpop.f32.mrf.mxu0
  %v502 = vadd.f32 %v400, %v501
  %v503 = vpop.f32.mrf.mxu0
  %504 = vmatprep.mubr.f32.mxu0 0.0
  %505 = vmatmul.mubr.f32.gmra.mxu0 %v410
  %v506 = vpop.f32.mrf.mxu0
  %v507 = vadd.f32 %v400, %v506
  %v508 = vpop.f32.mrf.mxu0
  %509 = vmatprep.mubr.f32.mxu0 0.0
  %510 = vmatmul.mubr.f32.gmra.mxu0 %v413
  %v511 = vpop.f32.mrf.mxu0
  %v512 = vadd.f32 %v400, %v511
  %v513 = vpop.f32.mrf.mxu0
  %514 = vmatprep.mubr.f32.mxu0 0.0
  %515 = vmatmul.mubr.f32.gmra.mxu0 %v416
  %v516 = vpop.f32.mrf.mxu0
  %v517 = vadd.f32 %v400, %v516
  %v518 = vpop.f32.mrf.mxu0
  %519 = vmatprep.mubr.f32.mxu0 0.0
  %520 = vmatmul.mubr.f32.gmra.mxu0 %v419
  %v521 = vpop.f32.mrf.mxu0
  %v522 = vadd.f32 %v400, %v521
  %v523 = vpop.f32.mrf.mxu0
  %524 = vmatprep.mubr.f32.mxu0 0.0
  %525 = vmatmul.mubr.f32.gmra.mxu0 %v422
  %v526 = vpop.f32.mrf.mxu0
  %v527 = vadd.f32 %v400, %v526
  %v528 = vpop.f32.mrf.mxu0
  %529 = vmatprep.mubr.f32.mxu0 0.0
  %530 = vmatmul.mubr.f32.gmra.mxu0 %v425
  %v531 = vpop.f32.mrf.mxu0
  %v532 = vadd.f32 %v400, %v531
  %v533 = vpop.f32.mrf.mxu0
  %534 = vmatprep.mubr.f32.mxu0 0.0
  %535 = vmatmul.mubr.f32.gmra.mxu0 %v428
  %v536 = vpop.f32.mrf.mxu0
  %v537 = vadd.f32 %v400, %v536
  %v538 = vpop.f32.mrf.mxu0
  %539 = vdwg.mxu0
  %v540 = vmax.f32 %v497, 0.0
  %v541 = vmax.f32 %v502, 0.0
  %v542 = vmax.f32 %v507, 0.0
  %v543 = vmax.f32 %v512, 0.0
  %v544 = vmax.f32 %v517, 0.0
  %v545 = vmax.f32 %v522, 0.0
  %v546 = vmax.f32 %v527, 0.0
  %v547 = vmax.f32 %v532, 0.0
  %v548 = vmax.f32 %v537, 0.0
  %v549 = vld [vmem:[%s5] sm:$0xff]
  %v550 = vld [vmem:[%s5 + $0x8] sm:$0xff]
  %v551 = vld [vmem:[%s5 + $0x10] sm:$0xff]
  %v552 = vld [vmem:[%s5 + $0x18] sm:$0xff]
  %vm553 = vcmask 130048
  %v555 = vsel %vm553, %v541, 0
  %557 = vmatprep.subr.mxu0 0.0
  %558 = vmatpush1.msra.mxu0 0.0
  %559 = vmatprep.subr.mxu0 0.0
  %560 = vmatpush1.msra.mxu0 0.0
  %561 = vmatprep.subr.mxu0 0.0
  %562 = vmatpush1.msra.mxu0 0.0
  %563 = vmatprep.subr.mxu0 0.0
  %564 = vmatpush1.msra.mxu0 0.0
  %565 = vmatprep.subr.mxu0 0.0
  %566 = vmatpush1.msra.mxu0 0.0
  %567 = vmatprep.subr.mxu0 0.0
  %568 = vmatpush1.msra.mxu0 0.0
  %569 = vmatprep.subr.mxu0 0.0
  %570 = vmatpush1.msra.mxu0 0.0
  %571 = vmatprep.subr.mxu0 0.0
  %572 = vmatpush1.msra.mxu0 0.0
  %573 = vmatprep.subr.mxu0 0.0
  %574 = vmatpush1.msra.mxu0 0.0
  %575 = vmatprep.subr.mxu0 0.0
  %576 = vmatpush1.msra.mxu0 0.0
  %577 = vmatprep.subr.mxu0 0.0
  %578 = vmatpush1.msra.mxu0 0.0
  %579 = vmatprep.subr.mxu0 0.0
  %580 = vmatpush1.msra.mxu0 0.0
  %581 = vmatprep.subr.mxu0 0.0
  %582 = vmatpush1.msra.mxu0 0.0
  %583 = vmatprep.subr.mxu0 0.0
  %584 = vmatpush1.msra.mxu0 0.0
  %585 = vmatprep.subr.mxu0 0.0
  %586 = vmatpush1.msra.mxu0 %v552
  %587 = vmatprep.subr.mxu0 0.0
  %588 = vmatpush1.msra.mxu0 %v551
  %589 = vmatprep.subr.mxu0 0.0
  %590 = vmatpush2.msra.mxu0 0.0
  %591 = vmatprep.subr.mxu0 0.0
  %592 = vmatpush2.msra.mxu0 0.0
  %593 = vmatprep.subr.mxu0 0.0
  %594 = vmatpush2.msra.mxu0 0.0
  %595 = vmatprep.subr.mxu0 0.0
  %596 = vmatpush2.msra.mxu0 0.0
  %597 = vmatprep.subr.mxu0 0.0
  %598 = vmatpush2.msra.mxu0 0.0
  %599 = vmatprep.subr.mxu0 0.0
  %600 = vmatpush2.msra.mxu0 0.0
  %601 = vmatprep.subr.mxu0 0.0
  %602 = vmatpush2.msra.mxu0 0.0
  %603 = vmatprep.subr.mxu0 0.0
  %604 = vmatpush2.msra.mxu0 0.0
  %605 = vmatprep.subr.mxu0 0.0
  %606 = vmatpush2.msra.mxu0 0.0
  %607 = vmatprep.subr.mxu0 0.0
  %608 = vmatpush2.msra.mxu0 0.0
  %609 = vmatprep.subr.mxu0 0.0
  %610 = vmatpush2.msra.mxu0 0.0
  %611 = vmatprep.subr.mxu0 0.0
  %612 = vmatpush2.msra.mxu0 0.0
  %613 = vmatprep.subr.mxu0 0.0
  %614 = vmatpush2.msra.mxu0 0.0
  %615 = vmatprep.subr.mxu0 0.0
  %616 = vmatpush2.msra.mxu0 0.0
  %617 = vmatprep.subr.mxu0 0.0
  %618 = vmatpush2.msra.mxu0 0.0
  %619 = vmatprep.subr.mxu0 0.0
  %620 = vmatpush2.msra.mxu0 0.0
  %621 = vmatprep.mubr.f32.mxu0 0.0
  %622 = vmatmul.mubr.f32.gmra.mxu0 %v555
  %v623 = vpop.f32.mrf.mxu0
  %v624 = vadd.f32 0.0, %v623
  %v625 = vpop.f32.mrf.mxu0
  %626 = vdwg.mxu0
  %v628 = vsel %vm553, %v540, 0
  %630 = vmatprep.subr.mxu0 0.0
  %631 = vmatpush1.msra.mxu0 0.0
  %632 = vmatprep.subr.mxu0 0.0
  %633 = vmatpush1.msra.mxu0 0.0
  %634 = vmatprep.subr.mxu0 0.0
  %635 = vmatpush1.msra.mxu0 0.0
  %636 = vmatprep.subr.mxu0 0.0
  %637 = vmatpush1.msra.mxu0 0.0
  %638 = vmatprep.subr.mxu0 0.0
  %639 = vmatpush1.msra.mxu0 0.0
  %640 = vmatprep.subr.mxu0 0.0
  %641 = vmatpush1.msra.mxu0 0.0
  %642 = vmatprep.subr.mxu0 0.0
  %643 = vmatpush1.msra.mxu0 0.0
  %644 = vmatprep.subr.mxu0 0.0
  %645 = vmatpush1.msra.mxu0 0.0
  %646 = vmatprep.subr.mxu0 0.0
  %647 = vmatpush1.msra.mxu0 0.0
  %648 = vmatprep.subr.mxu0 0.0
  %649 = vmatpush1.msra.mxu0 0.0
  %650 = vmatprep.subr.mxu0 0.0
  %651 = vmatpush1.msra.mxu0 0.0
  %652 = vmatprep.subr.mxu0 0.0
  %653 = vmatpush1.msra.mxu0 0.0
  %654 = vmatprep.subr.mxu0 0.0
  %655 = vmatpush1.msra.mxu0 0.0
  %656 = vmatprep.subr.mxu0 0.0
  %657 = vmatpush1.msra.mxu0 0.0
  %658 = vmatprep.subr.mxu0 0.0
  %659 = vmatpush1.msra.mxu0 %v550
  %660 = vmatprep.subr.mxu0 0.0
  %661 = vmatpush1.msra.mxu0 %v549
  %662 = vmatprep.subr.mxu0 0.0
  %663 = vmatpush2.msra.mxu0 0.0
  %664 = vmatprep.subr.mxu0 0.0
  %665 = vmatpush2.msra.mxu0 0.0
  %666 = vmatprep.subr.mxu0 0.0
  %667 = vmatpush2.msra.mxu0 0.0
  %668 = vmatprep.subr.mxu0 0.0
  %669 = vmatpush2.msra.mxu0 0.0
  %670 = vmatprep.subr.mxu0 0.0
  %671 = vmatpush2.msra.mxu0 0.0
  %672 = vmatprep.subr.mxu0 0.0
  %673 = vmatpush2.msra.mxu0 0.0
  %674 = vmatprep.subr.mxu0 0.0
  %675 = vmatpush2.msra.mxu0 0.0
  %676 = vmatprep.subr.mxu0 0.0
  %677 = vmatpush2.msra.mxu0 0.0
  %678 = vmatprep.subr.mxu0 0.0
  %679 = vmatpush2.msra.mxu0 0.0
  %680 = vmatprep.subr.mxu0 0.0
  %681 = vmatpush2.msra.mxu0 0.0
  %682 = vmatprep.subr.mxu0 0.0
  %683 = vmatpush2.msra.mxu0 0.0
  %684 = vmatprep.subr.mxu0 0.0
  %685 = vmatpush2.msra.mxu0 0.0
  %686 = vmatprep.subr.mxu0 0.0
  %687 = vmatpush2.msra.mxu0 0.0
  %688 = vmatprep.subr.mxu0 0.0
  %689 = vmatpush2.msra.mxu0 0.0
  %690 = vmatprep.subr.mxu0 0.0
  %691 = vmatpush2.msra.mxu0 0.0
  %692 = vmatprep.subr.mxu0 0.0
  %693 = vmatpush2.msra.mxu0 0.0
  %694 = vmatprep.mubr.f32.mxu0 0.0
  %695 = vmatmul.mubr.f32.gmra.mxu0 %v628
  %v696 = vpop.f32.mrf.mxu0
  %v697 = vadd.f32 %v624, %v696
  %v698 = vpop.f32.mrf.mxu0
  %699 = vdwg.mxu0
  %v700 = vld [vmem:[%s5 + $0x20] sm:$0xff]
  %v701 = vld [vmem:[%s5 + $0x28] sm:$0xff]
  %v703 = vsel %vm553, %v542, 0
  %705 = vmatprep.subr.mxu0 0.0
  %706 = vmatpush1.msra.mxu0 0.0
  %707 = vmatprep.subr.mxu0 0.0
  %708 = vmatpush1.msra.mxu0 0.0
  %709 = vmatprep.subr.mxu0 0.0
  %710 = vmatpush1.msra.mxu0 0.0
  %711 = vmatprep.subr.mxu0 0.0
  %712 = vmatpush1.msra.mxu0 0.0
  %713 = vmatprep.subr.mxu0 0.0
  %714 = vmatpush1.msra.mxu0 0.0
  %715 = vmatprep.subr.mxu0 0.0
  %716 = vmatpush1.msra.mxu0 0.0
  %717 = vmatprep.subr.mxu0 0.0
  %718 = vmatpush1.msra.mxu0 0.0
  %719 = vmatprep.subr.mxu0 0.0
  %720 = vmatpush1.msra.mxu0 0.0
  %721 = vmatprep.subr.mxu0 0.0
  %722 = vmatpush1.msra.mxu0 0.0
  %723 = vmatprep.subr.mxu0 0.0
  %724 = vmatpush1.msra.mxu0 0.0
  %725 = vmatprep.subr.mxu0 0.0
  %726 = vmatpush1.msra.mxu0 0.0
  %727 = vmatprep.subr.mxu0 0.0
  %728 = vmatpush1.msra.mxu0 0.0
  %729 = vmatprep.subr.mxu0 0.0
  %730 = vmatpush1.msra.mxu0 0.0
  %731 = vmatprep.subr.mxu0 0.0
  %732 = vmatpush1.msra.mxu0 0.0
  %733 = vmatprep.subr.mxu0 0.0
  %734 = vmatpush1.msra.mxu0 %v701
  %735 = vmatprep.subr.mxu0 0.0
  %736 = vmatpush1.msra.mxu0 %v700
  %737 = vmatprep.subr.mxu0 0.0
  %738 = vmatpush2.msra.mxu0 0.0
  %739 = vmatprep.subr.mxu0 0.0
  %740 = vmatpush2.msra.mxu0 0.0
  %741 = vmatprep.subr.mxu0 0.0
  %742 = vmatpush2.msra.mxu0 0.0
  %743 = vmatprep.subr.mxu0 0.0
  %744 = vmatpush2.msra.mxu0 0.0
  %745 = vmatprep.subr.mxu0 0.0
  %746 = vmatpush2.msra.mxu0 0.0
  %747 = vmatprep.subr.mxu0 0.0
  %748 = vmatpush2.msra.mxu0 0.0
  %749 = vmatprep.subr.mxu0 0.0
  %750 = vmatpush2.msra.mxu0 0.0
  %751 = vmatprep.subr.mxu0 0.0
  %752 = vmatpush2.msra.mxu0 0.0
  %753 = vmatprep.subr.mxu0 0.0
  %754 = vmatpush2.msra.mxu0 0.0
  %755 = vmatprep.subr.mxu0 0.0
  %756 = vmatpush2.msra.mxu0 0.0
  %757 = vmatprep.subr.mxu0 0.0
  %758 = vmatpush2.msra.mxu0 0.0
  %759 = vmatprep.subr.mxu0 0.0
  %760 = vmatpush2.msra.mxu0 0.0
  %761 = vmatprep.subr.mxu0 0.0
  %762 = vmatpush2.msra.mxu0 0.0
  %763 = vmatprep.subr.mxu0 0.0
  %764 = vmatpush2.msra.mxu0 0.0
  %765 = vmatprep.subr.mxu0 0.0
  %766 = vmatpush2.msra.mxu0 0.0
  %767 = vmatprep.subr.mxu0 0.0
  %768 = vmatpush2.msra.mxu0 0.0
  %769 = vmatprep.mubr.f32.mxu0 0.0
  %770 = vmatmul.mubr.f32.gmra.mxu0 %v703
  %v771 = vpop.f32.mrf.mxu0
  %v772 = vadd.f32 0.0, %v771
  %v773 = vpop.f32.mrf.mxu0
  %774 = vdwg.mxu0
  %v775 = vadd.f32 %v697, %v772
  %v776 = vld [vmem:[%s5 + $0x30] sm:$0xff]
  %v777 = vld [vmem:[%s5 + $0x38] sm:$0xff]
  %v779 = vsel %vm553, %v543, 0
  %781 = vmatprep.subr.mxu0 0.0
  %782 = vmatpush1.msra.mxu0 0.0
  %783 = vmatprep.subr.mxu0 0.0
  %784 = vmatpush1.msra.mxu0 0.0
  %785 = vmatprep.subr.mxu0 0.0
  %786 = vmatpush1.msra.mxu0 0.0
  %787 = vmatprep.subr.mxu0 0.0
  %788 = vmatpush1.msra.mxu0 0.0
  %789 = vmatprep.subr.mxu0 0.0
  %790 = vmatpush1.msra.mxu0 0.0
  %791 = vmatprep.subr.mxu0 0.0
  %792 = vmatpush1.msra.mxu0 0.0
  %793 = vmatprep.subr.mxu0 0.0
  %794 = vmatpush1.msra.mxu0 0.0
  %795 = vmatprep.subr.mxu0 0.0
  %796 = vmatpush1.msra.mxu0 0.0
  %797 = vmatprep.subr.mxu0 0.0
  %798 = vmatpush1.msra.mxu0 0.0
  %799 = vmatprep.subr.mxu0 0.0
  %800 = vmatpush1.msra.mxu0 0.0
  %801 = vmatprep.subr.mxu0 0.0
  %802 = vmatpush1.msra.mxu0 0.0
  %803 = vmatprep.subr.mxu0 0.0
  %804 = vmatpush1.msra.mxu0 0.0
  %805 = vmatprep.subr.mxu0 0.0
  %806 = vmatpush1.msra.mxu0 0.0
  %807 = vmatprep.subr.mxu0 0.0
  %808 = vmatpush1.msra.mxu0 0.0
  %809 = vmatprep.subr.mxu0 0.0
  %810 = vmatpush1.msra.mxu0 %v777
  %811 = vmatprep.subr.mxu0 0.0
  %812 = vmatpush1.msra.mxu0 %v776
  %813 = vmatprep.subr.mxu0 0.0
  %814 = vmatpush2.msra.mxu0 0.0
  %815 = vmatprep.subr.mxu0 0.0
  %816 = vmatpush2.msra.mxu0 0.0
  %817 = vmatprep.subr.mxu0 0.0
  %818 = vmatpush2.msra.mxu0 0.0
  %819 = vmatprep.subr.mxu0 0.0
  %820 = vmatpush2.msra.mxu0 0.0
  %821 = vmatprep.subr.mxu0 0.0
  %822 = vmatpush2.msra.mxu0 0.0
  %823 = vmatprep.subr.mxu0 0.0
  %824 = vmatpush2.msra.mxu0 0.0
  %825 = vmatprep.subr.mxu0 0.0
  %826 = vmatpush2.msra.mxu0 0.0
  %827 = vmatprep.subr.mxu0 0.0
  %828 = vmatpush2.msra.mxu0 0.0
  %829 = vmatprep.subr.mxu0 0.0
  %830 = vmatpush2.msra.mxu0 0.0
  %831 = vmatprep.subr.mxu0 0.0
  %832 = vmatpush2.msra.mxu0 0.0
  %833 = vmatprep.subr.mxu0 0.0
  %834 = vmatpush2.msra.mxu0 0.0
  %835 = vmatprep.subr.mxu0 0.0
  %836 = vmatpush2.msra.mxu0 0.0
  %837 = vmatprep.subr.mxu0 0.0
  %838 = vmatpush2.msra.mxu0 0.0
  %839 = vmatprep.subr.mxu0 0.0
  %840 = vmatpush2.msra.mxu0 0.0
  %841 = vmatprep.subr.mxu0 0.0
  %842 = vmatpush2.msra.mxu0 0.0
  %843 = vmatprep.subr.mxu0 0.0
  %844 = vmatpush2.msra.mxu0 0.0
  %845 = vmatprep.mubr.f32.mxu0 0.0
  %846 = vmatmul.mubr.f32.gmra.mxu0 %v779
  %v847 = vpop.f32.mrf.mxu0
  %v848 = vadd.f32 0.0, %v847
  %v849 = vpop.f32.mrf.mxu0
  %850 = vdwg.mxu0
  %v851 = vadd.f32 %v775, %v848
  %v852 = vld [vmem:[%s5 + $0x40] sm:$0xff]
  %v853 = vld [vmem:[%s5 + $0x48] sm:$0xff]
  %v855 = vsel %vm553, %v544, 0
  %857 = vmatprep.subr.mxu0 0.0
  %858 = vmatpush1.msra.mxu0 0.0
  %859 = vmatprep.subr.mxu0 0.0
  %860 = vmatpush1.msra.mxu0 0.0
  %861 = vmatprep.subr.mxu0 0.0
  %862 = vmatpush1.msra.mxu0 0.0
  %863 = vmatprep.subr.mxu0 0.0
  %864 = vmatpush1.msra.mxu0 0.0
  %865 = vmatprep.subr.mxu0 0.0
  %866 = vmatpush1.msra.mxu0 0.0
  %867 = vmatprep.subr.mxu0 0.0
  %868 = vmatpush1.msra.mxu0 0.0
  %869 = vmatprep.subr.mxu0 0.0
  %870 = vmatpush1.msra.mxu0 0.0
  %871 = vmatprep.subr.mxu0 0.0
  %872 = vmatpush1.msra.mxu0 0.0
  %873 = vmatprep.subr.mxu0 0.0
  %874 = vmatpush1.msra.mxu0 0.0
  %875 = vmatprep.subr.mxu0 0.0
  %876 = vmatpush1.msra.mxu0 0.0
  %877 = vmatprep.subr.mxu0 0.0
  %878 = vmatpush1.msra.mxu0 0.0
  %879 = vmatprep.subr.mxu0 0.0
  %880 = vmatpush1.msra.mxu0 0.0
  %881 = vmatprep.subr.mxu0 0.0
  %882 = vmatpush1.msra.mxu0 0.0
  %883 = vmatprep.subr.mxu0 0.0
  %884 = vmatpush1.msra.mxu0 0.0
  %885 = vmatprep.subr.mxu0 0.0
  %886 = vmatpush1.msra.mxu0 %v853
  %887 = vmatprep.subr.mxu0 0.0
  %888 = vmatpush1.msra.mxu0 %v852
  %889 = vmatprep.subr.mxu0 0.0
  %890 = vmatpush2.msra.mxu0 0.0
  %891 = vmatprep.subr.mxu0 0.0
  %892 = vmatpush2.msra.mxu0 0.0
  %893 = vmatprep.subr.mxu0 0.0
  %894 = vmatpush2.msra.mxu0 0.0
  %895 = vmatprep.subr.mxu0 0.0
  %896 = vmatpush2.msra.mxu0 0.0
  %897 = vmatprep.subr.mxu0 0.0
  %898 = vmatpush2.msra.mxu0 0.0
  %899 = vmatprep.subr.mxu0 0.0
  %900 = vmatpush2.msra.mxu0 0.0
  %901 = vmatprep.subr.mxu0 0.0
  %902 = vmatpush2.msra.mxu0 0.0
  %903 = vmatprep.subr.mxu0 0.0
  %904 = vmatpush2.msra.mxu0 0.0
  %905 = vmatprep.subr.mxu0 0.0
  %906 = vmatpush2.msra.mxu0 0.0
  %907 = vmatprep.subr.mxu0 0.0
  %908 = vmatpush2.msra.mxu0 0.0
  %909 = vmatprep.subr.mxu0 0.0
  %910 = vmatpush2.msra.mxu0 0.0
  %911 = vmatprep.subr.mxu0 0.0
  %912 = vmatpush2.msra.mxu0 0.0
  %913 = vmatprep.subr.mxu0 0.0
  %914 = vmatpush2.msra.mxu0 0.0
  %915 = vmatprep.subr.mxu0 0.0
  %916 = vmatpush2.msra.mxu0 0.0
  %917 = vmatprep.subr.mxu0 0.0
  %918 = vmatpush2.msra.mxu0 0.0
  %919 = vmatprep.subr.mxu0 0.0
  %920 = vmatpush2.msra.mxu0 0.0
  %921 = vmatprep.mubr.f32.mxu0 0.0
  %922 = vmatmul.mubr.f32.gmra.mxu0 %v855
  %v923 = vpop.f32.mrf.mxu0
  %v924 = vadd.f32 0.0, %v923
  %v925 = vpop.f32.mrf.mxu0
  %926 = vdwg.mxu0
  %v927 = vadd.f32 %v851, %v924
  %v928 = vld [vmem:[%s5 + $0x50] sm:$0xff]
  %v929 = vld [vmem:[%s5 + $0x58] sm:$0xff]
  %v931 = vsel %vm553, %v545, 0
  %933 = vmatprep.subr.mxu0 0.0
  %934 = vmatpush1.msra.mxu0 0.0
  %935 = vmatprep.subr.mxu0 0.0
  %936 = vmatpush1.msra.mxu0 0.0
  %937 = vmatprep.subr.mxu0 0.0
  %938 = vmatpush1.msra.mxu0 0.0
  %939 = vmatprep.subr.mxu0 0.0
  %940 = vmatpush1.msra.mxu0 0.0
  %941 = vmatprep.subr.mxu0 0.0
  %942 = vmatpush1.msra.mxu0 0.0
  %943 = vmatprep.subr.mxu0 0.0
  %944 = vmatpush1.msra.mxu0 0.0
  %945 = vmatprep.subr.mxu0 0.0
  %946 = vmatpush1.msra.mxu0 0.0
  %947 = vmatprep.subr.mxu0 0.0
  %948 = vmatpush1.msra.mxu0 0.0
  %949 = vmatprep.subr.mxu0 0.0
  %950 = vmatpush1.msra.mxu0 0.0
  %951 = vmatprep.subr.mxu0 0.0
  %952 = vmatpush1.msra.mxu0 0.0
  %953 = vmatprep.subr.mxu0 0.0
  %954 = vmatpush1.msra.mxu0 0.0
  %955 = vmatprep.subr.mxu0 0.0
  %956 = vmatpush1.msra.mxu0 0.0
  %957 = vmatprep.subr.mxu0 0.0
  %958 = vmatpush1.msra.mxu0 0.0
  %959 = vmatprep.subr.mxu0 0.0
  %960 = vmatpush1.msra.mxu0 0.0
  %961 = vmatprep.subr.mxu0 0.0
  %962 = vmatpush1.msra.mxu0 %v929
  %963 = vmatprep.subr.mxu0 0.0
  %964 = vmatpush1.msra.mxu0 %v928
  %965 = vmatprep.subr.mxu0 0.0
  %966 = vmatpush2.msra.mxu0 0.0
  %967 = vmatprep.subr.mxu0 0.0
  %968 = vmatpush2.msra.mxu0 0.0
  %969 = vmatprep.subr.mxu0 0.0
  %970 = vmatpush2.msra.mxu0 0.0
  %971 = vmatprep.subr.mxu0 0.0
  %972 = vmatpush2.msra.mxu0 0.0
  %973 = vmatprep.subr.mxu0 0.0
  %974 = vmatpush2.msra.mxu0 0.0
  %975 = vmatprep.subr.mxu0 0.0
  %976 = vmatpush2.msra.mxu0 0.0
  %977 = vmatprep.subr.mxu0 0.0
  %978 = vmatpush2.msra.mxu0 0.0
  %979 = vmatprep.subr.mxu0 0.0
  %980 = vmatpush2.msra.mxu0 0.0
  %981 = vmatprep.subr.mxu0 0.0
  %982 = vmatpush2.msra.mxu0 0.0
  %983 = vmatprep.subr.mxu0 0.0
  %984 = vmatpush2.msra.mxu0 0.0
  %985 = vmatprep.subr.mxu0 0.0
  %986 = vmatpush2.msra.mxu0 0.0
  %987 = vmatprep.subr.mxu0 0.0
  %988 = vmatpush2.msra.mxu0 0.0
  %989 = vmatprep.subr.mxu0 0.0
  %990 = vmatpush2.msra.mxu0 0.0
  %991 = vmatprep.subr.mxu0 0.0
  %992 = vmatpush2.msra.mxu0 0.0
  %993 = vmatprep.subr.mxu0 0.0
  %994 = vmatpush2.msra.mxu0 0.0
  %995 = vmatprep.subr.mxu0 0.0
  %996 = vmatpush2.msra.mxu0 0.0
  %997 = vmatprep.mubr.f32.mxu0 0.0
  %998 = vmatmul.mubr.f32.gmra.mxu0 %v931
  %v999 = vpop.f32.mrf.mxu0
  %v1000 = vadd.f32 0.0, %v999
  %v1001 = vpop.f32.mrf.mxu0
  %1002 = vdwg.mxu0
  %v1003 = vadd.f32 %v927, %v1000
  %v1004 = vld [vmem:[%s5 + $0x60] sm:$0xff]
  %v1005 = vld [vmem:[%s5 + $0x68] sm:$0xff]
  %v1007 = vsel %vm553, %v546, 0
  %1009 = vmatprep.subr.mxu0 0.0
  %1010 = vmatpush1.msra.mxu0 0.0
  %1011 = vmatprep.subr.mxu0 0.0
  %1012 = vmatpush1.msra.mxu0 0.0
  %1013 = vmatprep.subr.mxu0 0.0
  %1014 = vmatpush1.msra.mxu0 0.0
  %1015 = vmatprep.subr.mxu0 0.0
  %1016 = vmatpush1.msra.mxu0 0.0
  %1017 = vmatprep.subr.mxu0 0.0
  %1018 = vmatpush1.msra.mxu0 0.0
  %1019 = vmatprep.subr.mxu0 0.0
  %1020 = vmatpush1.msra.mxu0 0.0
  %1021 = vmatprep.subr.mxu0 0.0
  %1022 = vmatpush1.msra.mxu0 0.0
  %1023 = vmatprep.subr.mxu0 0.0
  %1024 = vmatpush1.msra.mxu0 0.0
  %1025 = vmatprep.subr.mxu0 0.0
  %1026 = vmatpush1.msra.mxu0 0.0
  %1027 = vmatprep.subr.mxu0 0.0
  %1028 = vmatpush1.msra.mxu0 0.0
  %1029 = vmatprep.subr.mxu0 0.0
  %1030 = vmatpush1.msra.mxu0 0.0
  %1031 = vmatprep.subr.mxu0 0.0
  %1032 = vmatpush1.msra.mxu0 0.0
  %1033 = vmatprep.subr.mxu0 0.0
  %1034 = vmatpush1.msra.mxu0 0.0
  %1035 = vmatprep.subr.mxu0 0.0
  %1036 = vmatpush1.msra.mxu0 0.0
  %1037 = vmatprep.subr.mxu0 0.0
  %1038 = vmatpush1.msra.mxu0 %v1005
  %1039 = vmatprep.subr.mxu0 0.0
  %1040 = vmatpush1.msra.mxu0 %v1004
  %1041 = vmatprep.subr.mxu0 0.0
  %1042 = vmatpush2.msra.mxu0 0.0
  %1043 = vmatprep.subr.mxu0 0.0
  %1044 = vmatpush2.msra.mxu0 0.0
  %1045 = vmatprep.subr.mxu0 0.0
  %1046 = vmatpush2.msra.mxu0 0.0
  %1047 = vmatprep.subr.mxu0 0.0
  %1048 = vmatpush2.msra.mxu0 0.0
  %1049 = vmatprep.subr.mxu0 0.0
  %1050 = vmatpush2.msra.mxu0 0.0
  %1051 = vmatprep.subr.mxu0 0.0
  %1052 = vmatpush2.msra.mxu0 0.0
  %1053 = vmatprep.subr.mxu0 0.0
  %1054 = vmatpush2.msra.mxu0 0.0
  %1055 = vmatprep.subr.mxu0 0.0
  %1056 = vmatpush2.msra.mxu0 0.0
  %1057 = vmatprep.subr.mxu0 0.0
  %1058 = vmatpush2.msra.mxu0 0.0
  %1059 = vmatprep.subr.mxu0 0.0
  %1060 = vmatpush2.msra.mxu0 0.0
  %1061 = vmatprep.subr.mxu0 0.0
  %1062 = vmatpush2.msra.mxu0 0.0
  %1063 = vmatprep.subr.mxu0 0.0
  %1064 = vmatpush2.msra.mxu0 0.0
  %1065 = vmatprep.subr.mxu0 0.0
  %1066 = vmatpush2.msra.mxu0 0.0
  %1067 = vmatprep.subr.mxu0 0.0
  %1068 = vmatpush2.msra.mxu0 0.0
  %1069 = vmatprep.subr.mxu0 0.0
  %1070 = vmatpush2.msra.mxu0 0.0
  %1071 = vmatprep.subr.mxu0 0.0
  %1072 = vmatpush2.msra.mxu0 0.0
  %1073 = vmatprep.mubr.f32.mxu0 0.0
  %1074 = vmatmul.mubr.f32.gmra.mxu0 %v1007
  %v1075 = vpop.f32.mrf.mxu0
  %v1076 = vadd.f32 0.0, %v1075
  %v1077 = vpop.f32.mrf.mxu0
  %1078 = vdwg.mxu0
  %v1079 = vadd.f32 %v1003, %v1076
  %v1080 = vld [vmem:[%s5 + $0x70] sm:$0xff]
  %v1081 = vld [vmem:[%s5 + $0x78] sm:$0xff]
  %v1083 = vsel %vm553, %v547, 0
  %1085 = vmatprep.subr.mxu0 0.0
  %1086 = vmatpush1.msra.mxu0 0.0
  %1087 = vmatprep.subr.mxu0 0.0
  %1088 = vmatpush1.msra.mxu0 0.0
  %1089 = vmatprep.subr.mxu0 0.0
  %1090 = vmatpush1.msra.mxu0 0.0
  %1091 = vmatprep.subr.mxu0 0.0
  %1092 = vmatpush1.msra.mxu0 0.0
  %1093 = vmatprep.subr.mxu0 0.0
  %1094 = vmatpush1.msra.mxu0 0.0
  %1095 = vmatprep.subr.mxu0 0.0
  %1096 = vmatpush1.msra.mxu0 0.0
  %1097 = vmatprep.subr.mxu0 0.0
  %1098 = vmatpush1.msra.mxu0 0.0
  %1099 = vmatprep.subr.mxu0 0.0
  %1100 = vmatpush1.msra.mxu0 0.0
  %1101 = vmatprep.subr.mxu0 0.0
  %1102 = vmatpush1.msra.mxu0 0.0
  %1103 = vmatprep.subr.mxu0 0.0
  %1104 = vmatpush1.msra.mxu0 0.0
  %1105 = vmatprep.subr.mxu0 0.0
  %1106 = vmatpush1.msra.mxu0 0.0
  %1107 = vmatprep.subr.mxu0 0.0
  %1108 = vmatpush1.msra.mxu0 0.0
  %1109 = vmatprep.subr.mxu0 0.0
  %1110 = vmatpush1.msra.mxu0 0.0
  %1111 = vmatprep.subr.mxu0 0.0
  %1112 = vmatpush1.msra.mxu0 0.0
  %1113 = vmatprep.subr.mxu0 0.0
  %1114 = vmatpush1.msra.mxu0 %v1081
  %1115 = vmatprep.subr.mxu0 0.0
  %1116 = vmatpush1.msra.mxu0 %v1080
  %1117 = vmatprep.subr.mxu0 0.0
  %1118 = vmatpush2.msra.mxu0 0.0
  %1119 = vmatprep.subr.mxu0 0.0
  %1120 = vmatpush2.msra.mxu0 0.0
  %1121 = vmatprep.subr.mxu0 0.0
  %1122 = vmatpush2.msra.mxu0 0.0
  %1123 = vmatprep.subr.mxu0 0.0
  %1124 = vmatpush2.msra.mxu0 0.0
  %1125 = vmatprep.subr.mxu0 0.0
  %1126 = vmatpush2.msra.mxu0 0.0
  %1127 = vmatprep.subr.mxu0 0.0
  %1128 = vmatpush2.msra.mxu0 0.0
  %1129 = vmatprep.subr.mxu0 0.0
  %1130 = vmatpush2.msra.mxu0 0.0
  %1131 = vmatprep.subr.mxu0 0.0
  %1132 = vmatpush2.msra.mxu0 0.0
  %1133 = vmatprep.subr.mxu0 0.0
  %1134 = vmatpush2.msra.mxu0 0.0
  %1135 = vmatprep.subr.mxu0 0.0
  %1136 = vmatpush2.msra.mxu0 0.0
  %1137 = vmatprep.subr.mxu0 0.0
  %1138 = vmatpush2.msra.mxu0 0.0
  %1139 = vmatprep.subr.mxu0 0.0
  %1140 = vmatpush2.msra.mxu0 0.0
  %1141 = vmatprep.subr.mxu0 0.0
  %1142 = vmatpush2.msra.mxu0 0.0
  %1143 = vmatprep.subr.mxu0 0.0
  %1144 = vmatpush2.msra.mxu0 0.0
  %1145 = vmatprep.subr.mxu0 0.0
  %1146 = vmatpush2.msra.mxu0 0.0
  %1147 = vmatprep.subr.mxu0 0.0
  %1148 = vmatpush2.msra.mxu0 0.0
  %1149 = vmatprep.mubr.f32.mxu0 0.0
  %1150 = vmatmul.mubr.f32.gmra.mxu0 %v1083
  %v1151 = vpop.f32.mrf.mxu0
  %v1152 = vadd.f32 0.0, %v1151
  %v1153 = vpop.f32.mrf.mxu0
  %1154 = vdwg.mxu0
  %v1155 = vadd.f32 %v1079, %v1152
  %v1156 = vld [vmem:[%s5 + $0x80] sm:$0xff]
  %v1157 = vld [vmem:[%s5 + $0x88] sm:$0xff]
  %v1159 = vsel %vm553, %v548, 0
  %1161 = vmatprep.subr.mxu0 0.0
  %1162 = vmatpush1.msra.mxu0 0.0
  %1163 = vmatprep.subr.mxu0 0.0
  %1164 = vmatpush1.msra.mxu0 0.0
  %1165 = vmatprep.subr.mxu0 0.0
  %1166 = vmatpush1.msra.mxu0 0.0
  %1167 = vmatprep.subr.mxu0 0.0
  %1168 = vmatpush1.msra.mxu0 0.0
  %1169 = vmatprep.subr.mxu0 0.0
  %1170 = vmatpush1.msra.mxu0 0.0
  %1171 = vmatprep.subr.mxu0 0.0
  %1172 = vmatpush1.msra.mxu0 0.0
  %1173 = vmatprep.subr.mxu0 0.0
  %1174 = vmatpush1.msra.mxu0 0.0
  %1175 = vmatprep.subr.mxu0 0.0
  %1176 = vmatpush1.msra.mxu0 0.0
  %1177 = vmatprep.subr.mxu0 0.0
  %1178 = vmatpush1.msra.mxu0 0.0
  %1179 = vmatprep.subr.mxu0 0.0
  %1180 = vmatpush1.msra.mxu0 0.0
  %1181 = vmatprep.subr.mxu0 0.0
  %1182 = vmatpush1.msra.mxu0 0.0
  %1183 = vmatprep.subr.mxu0 0.0
  %1184 = vmatpush1.msra.mxu0 0.0
  %1185 = vmatprep.subr.mxu0 0.0
  %1186 = vmatpush1.msra.mxu0 0.0
  %1187 = vmatprep.subr.mxu0 0.0
  %1188 = vmatpush1.msra.mxu0 0.0
  %1189 = vmatprep.subr.mxu0 0.0
  %1190 = vmatpush1.msra.mxu0 %v1157
  %1191 = vmatprep.subr.mxu0 0.0
  %1192 = vmatpush1.msra.mxu0 %v1156
  %1193 = vmatprep.subr.mxu0 0.0
  %1194 = vmatpush2.msra.mxu0 0.0
  %1195 = vmatprep.subr.mxu0 0.0
  %1196 = vmatpush2.msra.mxu0 0.0
  %1197 = vmatprep.subr.mxu0 0.0
  %1198 = vmatpush2.msra.mxu0 0.0
  %1199 = vmatprep.subr.mxu0 0.0
  %1200 = vmatpush2.msra.mxu0 0.0
  %1201 = vmatprep.subr.mxu0 0.0
  %1202 = vmatpush2.msra.mxu0 0.0
  %1203 = vmatprep.subr.mxu0 0.0
  %1204 = vmatpush2.msra.mxu0 0.0
  %1205 = vmatprep.subr.mxu0 0.0
  %1206 = vmatpush2.msra.mxu0 0.0
  %1207 = vmatprep.subr.mxu0 0.0
  %1208 = vmatpush2.msra.mxu0 0.0
  %1209 = vmatprep.subr.mxu0 0.0
  %1210 = vmatpush2.msra.mxu0 0.0
  %1211 = vmatprep.subr.mxu0 0.0
  %1212 = vmatpush2.msra.mxu0 0.0
  %1213 = vmatprep.subr.mxu0 0.0
  %1214 = vmatpush2.msra.mxu0 0.0
  %1215 = vmatprep.subr.mxu0 0.0
  %1216 = vmatpush2.msra.mxu0 0.0
  %1217 = vmatprep.subr.mxu0 0.0
  %1218 = vmatpush2.msra.mxu0 0.0
  %1219 = vmatprep.subr.mxu0 0.0
  %1220 = vmatpush2.msra.mxu0 0.0
  %1221 = vmatprep.subr.mxu0 0.0
  %1222 = vmatpush2.msra.mxu0 0.0
  %1223 = vmatprep.subr.mxu0 0.0
  %1224 = vmatpush2.msra.mxu0 0.0
  %1225 = vmatprep.mubr.f32.mxu0 0.0
  %1226 = vmatmul.mubr.f32.gmra.mxu0 %v1159
  %v1227 = vpop.f32.mrf.mxu0
  %v1228 = vadd.f32 0.0, %v1227
  %v1229 = vpop.f32.mrf.mxu0
  %1230 = vdwg.mxu0
  %v1231 = vadd.f32 %v1155, %v1228
  %v1232 = vld [vmem:[%s6] sm:$0x1]
  %v1234 = vlaneseq
  %v1235 = vshrl.u32 %v1234, 7
  %v1236 = vsub.s32 0, %v1235
  %v1237 = vrot.slane %v1232, %v1236
  %v1239 = vadd.f32 %v1231, %v1237
  %v1240 = vmax.f32 %v1239, 0.0
  %v1241 = vld [vmem:[%s7] sm:$0xff]
  %v1242 = vld [vmem:[%s7 + $0x8] sm:$0xff]
  %v1243 = vld [vmem:[%s7 + $0x10] sm:$0xff]
  %v1244 = vld [vmem:[%s7 + $0x18] sm:$0xff]
  %v1245 = vld [vmem:[%s7 + $0x20] sm:$0xff]
  %v1246 = vld [vmem:[%s7 + $0x28] sm:$0xff]
  %v1247 = vld [vmem:[%s7 + $0x30] sm:$0xff]
  %v1248 = vld [vmem:[%s7 + $0x38] sm:$0xff]
  %v1249 = vld [vmem:[%s8] sm:$0x1]
  %v1251 = vlaneseq
  %v1252 = vshrl.u32 %v1251, 7
  %v1253 = vsub.s32 0, %v1252
  %v1254 = vrot.slane %v1249, %v1253
  %vm1256 = vcmask 523264
  %v1258 = vsel %vm1256, %v1240, 0
  %1260 = vmatprep.subr.mxu0 0.0
  %1261 = vmatpush1.msra.mxu0 0.0
  %1262 = vmatprep.subr.mxu0 0.0
  %1263 = vmatpush1.msra.mxu0 0.0
  %1264 = vmatprep.subr.mxu0 0.0
  %1265 = vmatpush1.msra.mxu0 0.0
  %1266 = vmatprep.subr.mxu0 0.0
  %1267 = vmatpush1.msra.mxu0 0.0
  %1268 = vmatprep.subr.mxu0 0.0
  %1269 = vmatpush1.msra.mxu0 0.0
  %1270 = vmatprep.subr.mxu0 0.0
  %1271 = vmatpush1.msra.mxu0 0.0
  %1272 = vmatprep.subr.mxu0 0.0
  %1273 = vmatpush1.msra.mxu0 0.0
  %1274 = vmatprep.subr.mxu0 0.0
  %1275 = vmatpush1.msra.mxu0 0.0
  %1276 = vmatprep.subr.mxu0 0.0
  %1277 = vmatpush1.msra.mxu0 %v1248
  %1278 = vmatprep.subr.mxu0 0.0
  %1279 = vmatpush1.msra.mxu0 %v1247
  %1280 = vmatprep.subr.mxu0 0.0
  %1281 = vmatpush1.msra.mxu0 %v1246
  %1282 = vmatprep.subr.mxu0 0.0
  %1283 = vmatpush1.msra.mxu0 %v1245
  %1284 = vmatprep.subr.mxu0 0.0
  %1285 = vmatpush1.msra.mxu0 %v1244
  %1286 = vmatprep.subr.mxu0 0.0
  %1287 = vmatpush1.msra.mxu0 %v1243
  %1288 = vmatprep.subr.mxu0 0.0
  %1289 = vmatpush1.msra.mxu0 %v1242
  %1290 = vmatprep.subr.mxu0 0.0
  %1291 = vmatpush1.msra.mxu0 %v1241
  %1292 = vmatprep.subr.mxu0 0.0
  %1293 = vmatpush2.msra.mxu0 0.0
  %1294 = vmatprep.subr.mxu0 0.0
  %1295 = vmatpush2.msra.mxu0 0.0
  %1296 = vmatprep.subr.mxu0 0.0
  %1297 = vmatpush2.msra.mxu0 0.0
  %1298 = vmatprep.subr.mxu0 0.0
  %1299 = vmatpush2.msra.mxu0 0.0
  %1300 = vmatprep.subr.mxu0 0.0
  %1301 = vmatpush2.msra.mxu0 0.0
  %1302 = vmatprep.subr.mxu0 0.0
  %1303 = vmatpush2.msra.mxu0 0.0
  %1304 = vmatprep.subr.mxu0 0.0
  %1305 = vmatpush2.msra.mxu0 0.0
  %1306 = vmatprep.subr.mxu0 0.0
  %1307 = vmatpush2.msra.mxu0 0.0
  %1308 = vmatprep.subr.mxu0 0.0
  %1309 = vmatpush2.msra.mxu0 0.0
  %1310 = vmatprep.subr.mxu0 0.0
  %1311 = vmatpush2.msra.mxu0 0.0
  %1312 = vmatprep.subr.mxu0 0.0
  %1313 = vmatpush2.msra.mxu0 0.0
  %1314 = vmatprep.subr.mxu0 0.0
  %1315 = vmatpush2.msra.mxu0 0.0
  %1316 = vmatprep.subr.mxu0 0.0
  %1317 = vmatpush2.msra.mxu0 0.0
  %1318 = vmatprep.subr.mxu0 0.0
  %1319 = vmatpush2.msra.mxu0 0.0
  %1320 = vmatprep.subr.mxu0 0.0
  %1321 = vmatpush2.msra.mxu0 0.0
  %1322 = vmatprep.subr.mxu0 0.0
  %1323 = vmatpush2.msra.mxu0 0.0
  %1324 = vmatprep.mubr.f32.mxu0 0.0
  %1325 = vmatmul.mubr.f32.gmra.mxu0 %v1258
  %v1326 = vpop.f32.mrf.mxu0
  %v1327 = vadd.f32 %v1254, %v1326
  %v1328 = vpop.f32.mrf.mxu0
  %1329 = vdwg.mxu0
  %v1330 = vld [vmem:[%s9] sm:$0xff]
  %v1331 = vld [vmem:[%s9 + $0x8] sm:$0xff]
  %v1332 = vld [vmem:[%s9 + $0x10] sm:$0xff]
  %v1333 = vld [vmem:[%s9 + $0x18] sm:$0xff]
  %v1334 = vld [vmem:[%s10] sm:$0x1]
  %v1336 = vlaneseq
  %v1337 = vshrl.u32 %v1336, 7
  %v1338 = vsub.s32 0, %v1337
  %v1339 = vrot.slane %v1334, %v1338
  %vm1341 = vcmask 261120
  %v1343 = vsel %vm1341, %v1327, 0
  %1345 = vmatprep.subr.mxu0 0.0
  %1346 = vmatpush1.msra.mxu0 0.0
  %1347 = vmatprep.subr.mxu0 0.0
  %1348 = vmatpush1.msra.mxu0 0.0
  %1349 = vmatprep.subr.mxu0 0.0
  %1350 = vmatpush1.msra.mxu0 0.0
  %1351 = vmatprep.subr.mxu0 0.0
  %1352 = vmatpush1.msra.mxu0 0.0
  %1353 = vmatprep.subr.mxu0 0.0
  %1354 = vmatpush1.msra.mxu0 0.0
  %1355 = vmatprep.subr.mxu0 0.0
  %1356 = vmatpush1.msra.mxu0 0.0
  %1357 = vmatprep.subr.mxu0 0.0
  %1358 = vmatpush1.msra.mxu0 0.0
  %1359 = vmatprep.subr.mxu0 0.0
  %1360 = vmatpush1.msra.mxu0 0.0
  %1361 = vmatprep.subr.mxu0 0.0
  %1362 = vmatpush1.msra.mxu0 0.0
  %1363 = vmatprep.subr.mxu0 0.0
  %1364 = vmatpush1.msra.mxu0 0.0
  %1365 = vmatprep.subr.mxu0 0.0
  %1366 = vmatpush1.msra.mxu0 0.0
  %1367 = vmatprep.subr.mxu0 0.0
  %1368 = vmatpush1.msra.mxu0 0.0
  %1369 = vmatprep.subr.mxu0 0.0
  %1370 = vmatpush1.msra.mxu0 %v1333
  %1371 = vmatprep.subr.mxu0 0.0
  %1372 = vmatpush1.msra.mxu0 %v1332
  %1373 = vmatprep.subr.mxu0 0.0
  %1374 = vmatpush1.msra.mxu0 %v1331
  %1375 = vmatprep.subr.mxu0 0.0
  %1376 = vmatpush1.msra.mxu0 %v1330
  %1377 = vmatprep.subr.mxu0 0.0
  %1378 = vmatpush2.msra.mxu0 0.0
  %1379 = vmatprep.subr.mxu0 0.0
  %1380 = vmatpush2.msra.mxu0 0.0
  %1381 = vmatprep.subr.mxu0 0.0
  %1382 = vmatpush2.msra.mxu0 0.0
  %1383 = vmatprep.subr.mxu0 0.0
  %1384 = vmatpush2.msra.mxu0 0.0
  %1385 = vmatprep.subr.mxu0 0.0
  %1386 = vmatpush2.msra.mxu0 0.0
  %1387 = vmatprep.subr.mxu0 0.0
  %1388 = vmatpush2.msra.mxu0 0.0
  %1389 = vmatprep.subr.mxu0 0.0
  %1390 = vmatpush2.msra.mxu0 0.0
  %1391 = vmatprep.subr.mxu0 0.0
  %1392 = vmatpush2.msra.mxu0 0.0
  %1393 = vmatprep.subr.mxu0 0.0
  %1394 = vmatpush2.msra.mxu0 0.0
  %1395 = vmatprep.subr.mxu0 0.0
  %1396 = vmatpush2.msra.mxu0 0.0
  %1397 = vmatprep.subr.mxu0 0.0
  %1398 = vmatpush2.msra.mxu0 0.0
  %1399 = vmatprep.subr.mxu0 0.0
  %1400 = vmatpush2.msra.mxu0 0.0
  %1401 = vmatprep.subr.mxu0 0.0
  %1402 = vmatpush2.msra.mxu0 0.0
  %1403 = vmatprep.subr.mxu0 0.0
  %1404 = vmatpush2.msra.mxu0 0.0
  %1405 = vmatprep.subr.mxu0 0.0
  %1406 = vmatpush2.msra.mxu0 0.0
  %1407 = vmatprep.subr.mxu0 0.0
  %1408 = vmatpush2.msra.mxu0 0.0
  %1409 = vmatprep.mubr.f32.mxu0 0.0
  %1410 = vmatmul.mubr.f32.gmra.mxu0 %v1343
  %v1411 = vpop.f32.mrf.mxu0
  %v1412 = vadd.f32 %v1339, %v1411
  %v1413 = vpop.f32.mrf.mxu0
  %1414 = vdwg.mxu0
  %v1415 = vmax.f32 %v1412, 0.0
  %v1416 = vld [vmem:[%s11] sm:$0xff]
  %v1417 = vld [vmem:[%s11 + $0x8] sm:$0xff]
  %v1418 = vld [vmem:[%s11 + $0x10] sm:$0xff]
  %v1419 = vld [vmem:[%s11 + $0x18] sm:$0xff]
  %v1420 = vld [vmem:[%s12] sm:$0x1]
  %v1422 = vlaneseq
  %v1423 = vshrl.u32 %v1422, 7
  %v1424 = vsub.s32 0, %v1423
  %v1425 = vrot.slane %v1420, %v1424
  %v1428 = vsel %vm1341, %v1415, 0
  %1430 = vmatprep.subr.mxu0 0.0
  %1431 = vmatpush1.msra.mxu0 0.0
  %1432 = vmatprep.subr.mxu0 0.0
  %1433 = vmatpush1.msra.mxu0 0.0
  %1434 = vmatprep.subr.mxu0 0.0
  %1435 = vmatpush1.msra.mxu0 0.0
  %1436 = vmatprep.subr.mxu0 0.0
  %1437 = vmatpush1.msra.mxu0 0.0
  %1438 = vmatprep.subr.mxu0 0.0
  %1439 = vmatpush1.msra.mxu0 0.0
  %1440 = vmatprep.subr.mxu0 0.0
  %1441 = vmatpush1.msra.mxu0 0.0
  %1442 = vmatprep.subr.mxu0 0.0
  %1443 = vmatpush1.msra.mxu0 0.0
  %1444 = vmatprep.subr.mxu0 0.0
  %1445 = vmatpush1.msra.mxu0 0.0
  %1446 = vmatprep.subr.mxu0 0.0
  %1447 = vmatpush1.msra.mxu0 0.0
  %1448 = vmatprep.subr.mxu0 0.0
  %1449 = vmatpush1.msra.mxu0 0.0
  %1450 = vmatprep.subr.mxu0 0.0
  %1451 = vmatpush1.msra.mxu0 0.0
  %1452 = vmatprep.subr.mxu0 0.0
  %1453 = vmatpush1.msra.mxu0 0.0
  %1454 = vmatprep.subr.mxu0 0.0
  %1455 = vmatpush1.msra.mxu0 %v1419
  %1456 = vmatprep.subr.mxu0 0.0
  %1457 = vmatpush1.msra.mxu0 %v1418
  %1458 = vmatprep.subr.mxu0 0.0
  %1459 = vmatpush1.msra.mxu0 %v1417
  %1460 = vmatprep.subr.mxu0 0.0
  %1461 = vmatpush1.msra.mxu0 %v1416
  %1462 = vmatprep.subr.mxu0 0.0
  %1463 = vmatpush2.msra.mxu0 0.0
  %1464 = vmatprep.subr.mxu0 0.0
  %1465 = vmatpush2.msra.mxu0 0.0
  %1466 = vmatprep.subr.mxu0 0.0
  %1467 = vmatpush2.msra.mxu0 0.0
  %1468 = vmatprep.subr.mxu0 0.0
  %1469 = vmatpush2.msra.mxu0 0.0
  %1470 = vmatprep.subr.mxu0 0.0
  %1471 = vmatpush2.msra.mxu0 0.0
  %1472 = vmatprep.subr.mxu0 0.0
  %1473 = vmatpush2.msra.mxu0 0.0
  %1474 = vmatprep.subr.mxu0 0.0
  %1475 = vmatpush2.msra.mxu0 0.0
  %1476 = vmatprep.subr.mxu0 0.0
  %1477 = vmatpush2.msra.mxu0 0.0
  %1478 = vmatprep.subr.mxu0 0.0
  %1479 = vmatpush2.msra.mxu0 0.0
  %1480 = vmatprep.subr.mxu0 0.0
  %1481 = vmatpush2.msra.mxu0 0.0
  %1482 = vmatprep.subr.mxu0 0.0
  %1483 = vmatpush2.msra.mxu0 0.0
  %1484 = vmatprep.subr.mxu0 0.0
  %1485 = vmatpush2.msra.mxu0 0.0
  %1486 = vmatprep.subr.mxu0 0.0
  %1487 = vmatpush2.msra.mxu0 0.0
  %1488 = vmatprep.subr.mxu0 0.0
  %1489 = vmatpush2.msra.mxu0 0.0
  %1490 = vmatprep.subr.mxu0 0.0
  %1491 = vmatpush2.msra.mxu0 0.0
  %1492 = vmatprep.subr.mxu0 0.0
  %1493 = vmatpush2.msra.mxu0 0.0
  %1494 = vmatprep.mubr.f32.mxu0 0.0
  %1495 = vmatmul.mubr.f32.gmra.mxu0 %v1428
  %v1496 = vpop.f32.mrf.mxu0
  %v1497 = vadd.f32 %v1425, %v1496
  %v1498 = vpop.f32.mrf.mxu0
  %1499 = vdwg.mxu0
  %v1500 = vmax.f32 %v1497, 0.0
  %v1501 = vld [vmem:[%s13] sm:$0xff]
  %v1502 = vld [vmem:[%s13 + $0x8] sm:$0xff]
  %v1503 = vld [vmem:[%s13 + $0x10] sm:$0xff]
  %v1504 = vld [vmem:[%s13 + $0x18] sm:$0xff]
  %v1505 = vld [vmem:[%s14] sm:$0x1]
  %v1507 = vlaneseq
  %v1508 = vshrl.u32 %v1507, 7
  %v1509 = vsub.s32 0, %v1508
  %v1510 = vrot.slane %v1505, %v1509
  %v1513 = vsel %vm1341, %v1500, 0
  %1515 = vmatprep.subr.mxu0 0.0
  %1516 = vmatpush1.msra.mxu0 0.0
  %1517 = vmatprep.subr.mxu0 0.0
  %1518 = vmatpush1.msra.mxu0 0.0
  %1519 = vmatprep.subr.mxu0 0.0
  %1520 = vmatpush1.msra.mxu0 0.0
  %1521 = vmatprep.subr.mxu0 0.0
  %1522 = vmatpush1.msra.mxu0 0.0
  %1523 = vmatprep.subr.mxu0 0.0
  %1524 = vmatpush1.msra.mxu0 0.0
  %1525 = vmatprep.subr.mxu0 0.0
  %1526 = vmatpush1.msra.mxu0 0.0
  %1527 = vmatprep.subr.mxu0 0.0
  %1528 = vmatpush1.msra.mxu0 0.0
  %1529 = vmatprep.subr.mxu0 0.0
  %1530 = vmatpush1.msra.mxu0 0.0
  %1531 = vmatprep.subr.mxu0 0.0
  %1532 = vmatpush1.msra.mxu0 0.0
  %1533 = vmatprep.subr.mxu0 0.0
  %1534 = vmatpush1.msra.mxu0 0.0
  %1535 = vmatprep.subr.mxu0 0.0
  %1536 = vmatpush1.msra.mxu0 0.0
  %1537 = vmatprep.subr.mxu0 0.0
  %1538 = vmatpush1.msra.mxu0 0.0
  %1539 = vmatprep.subr.mxu0 0.0
  %1540 = vmatpush1.msra.mxu0 %v1504
  %1541 = vmatprep.subr.mxu0 0.0
  %1542 = vmatpush1.msra.mxu0 %v1503
  %1543 = vmatprep.subr.mxu0 0.0
  %1544 = vmatpush1.msra.mxu0 %v1502
  %1545 = vmatprep.subr.mxu0 0.0
  %1546 = vmatpush1.msra.mxu0 %v1501
  %1547 = vmatprep.subr.mxu0 0.0
  %1548 = vmatpush2.msra.mxu0 0.0
  %1549 = vmatprep.subr.mxu0 0.0
  %1550 = vmatpush2.msra.mxu0 0.0
  %1551 = vmatprep.subr.mxu0 0.0
  %1552 = vmatpush2.msra.mxu0 0.0
  %1553 = vmatprep.subr.mxu0 0.0
  %1554 = vmatpush2.msra.mxu0 0.0
  %1555 = vmatprep.subr.mxu0 0.0
  %1556 = vmatpush2.msra.mxu0 0.0
  %1557 = vmatprep.subr.mxu0 0.0
  %1558 = vmatpush2.msra.mxu0 0.0
  %1559 = vmatprep.subr.mxu0 0.0
  %1560 = vmatpush2.msra.mxu0 0.0
  %1561 = vmatprep.subr.mxu0 0.0
  %1562 = vmatpush2.msra.mxu0 0.0
  %1563 = vmatprep.subr.mxu0 0.0
  %1564 = vmatpush2.msra.mxu0 0.0
  %1565 = vmatprep.subr.mxu0 0.0
  %1566 = vmatpush2.msra.mxu0 0.0
  %1567 = vmatprep.subr.mxu0 0.0
  %1568 = vmatpush2.msra.mxu0 0.0
  %1569 = vmatprep.subr.mxu0 0.0
  %1570 = vmatpush2.msra.mxu0 0.0
  %1571 = vmatprep.subr.mxu0 0.0
  %1572 = vmatpush2.msra.mxu0 0.0
  %1573 = vmatprep.subr.mxu0 0.0
  %1574 = vmatpush2.msra.mxu0 0.0
  %1575 = vmatprep.subr.mxu0 0.0
  %1576 = vmatpush2.msra.mxu0 0.0
  %1577 = vmatprep.subr.mxu0 0.0
  %1578 = vmatpush2.msra.mxu0 0.0
  %1579 = vmatprep.mubr.f32.mxu0 0.0
  %1580 = vmatmul.mubr.f32.gmra.mxu0 %v1513
  %v1581 = vpop.f32.mrf.mxu0
  %v1582 = vadd.f32 %v1510, %v1581
  %v1583 = vpop.f32.mrf.mxu0
  %1584 = vdwg.mxu0
  %1585 = vst [vmem:[%s15] sm:$0xff] %v1582
  // Predicated region
  $region62: #{visual_critic_forward.1} parent=0 // pred_check
    _
  $region63: #{visual_critic_forward.1} parent=0 // pred_check_branch
    %1587 = sbr.rel (0) target = $region65
  $region64: #{visual_critic_forward.1} parent=0 // pred_region
    _
  $region65: #{visual_critic_forward.1} parent=0 // pred_fallthru
    _
  // Predicated region
  $region66: #{visual_critic_forward.1} parent=0 // pred_check
    _
  $region67: #{visual_critic_forward.1} parent=0 // pred_check_branch
    %1589 = sbr.rel (0) target = $region69
  $region68: #{visual_critic_forward.1} parent=0 // pred_region
    _
  $region69: #{visual_critic_forward.1} parent=0 // pred_fallthru
    _

</llo_original>
